<compile_context>
chip_gen: v7x
topology: tpu7x:2x2x1
jax: 0.10.0
libtpu: 0.0.40
codegen_flags: <defaults>
</compile_context>

<pallas_src>
import math
from functools import partial

import numpy as np
import jax
import jax.numpy as jnp
from jax.experimental import pallas as pl
from jax.experimental.pallas import tpu as pltpu


def _round_up(x, m):
    return ((x + m - 1) // m) * m


def _vmem_budget_bytes():
    """(scoped vmem limit to request, byte budget for double-buffered blocks)."""
    try:
        phys = int(pltpu.get_tpu_info().vmem_capacity_bytes)
    except Exception:
        phys = 64 * 1024 * 1024          # v7x per-TC VMEM (smallest of the three gens)
    scoped = phys // 2                    # leave headroom for compiler scratch
    return scoped, scoped // 2            # cap our blocks at ~50% of the scoped limit


def _pick_images_per_step(n, c_in, c_out, hp, wp, max_off, budget):
    """VMEM-aware images-per-grid-step.  Prefers one big step; splits only when
    the block would exceed the budget, or (megacore) when halving still leaves
    >= ~1 MiB of per-step traffic to amortize the fixed step overhead."""
    def step_bytes(b):
        lout = _round_up(b * hp * wp, 128)
        lblk = _round_up(lout + max_off, 128)
        # double-buffered bf16 input block + double-buffered f32 output block
        return 2 * (c_in * lblk * 2) + 2 * (c_out * lout * 4)

    b = n
    while b > 1 and step_bytes(b) > budget:
        b = (b + 1) // 2
    if b == n and n > 1 and step_bytes((n + 1) // 2) >= (1 << 20):
        b = (n + 1) // 2                  # give v7x's second TensorCore real work
    return b


def _conv_tap_kernel(w_ref, b_ref, x_ref, o_ref, *, n_taps, k_w, wp, lout):
    # w_ref: (n_taps, C_out, C_in) bf16   (grid-resident, constant block index)
    # b_ref: (C_out, 1)            f32    (grid-resident)
    # x_ref: (C_in, Lblk)          bf16   flattened padded images, lane-dense
    # o_ref: (C_out, Lout)         f32    flattened stride-1 "full" conv output
    c_out = o_ref.shape[0]
    xv = x_ref[...]                                        # single VMEM load of the slab
    # bias folded into the accumulator init (one lane-broadcast, no extra add)
    acc = jnp.broadcast_to(b_ref[...], (c_out, lout)).astype(jnp.float32)
    for t in range(n_taps):                                # static unroll over taps
        p, q = divmod(t, k_w)
        off = p * wp + q                                   # static flat tap offset
        acc = acc + jnp.dot(w_ref[t], xv[:, off:off + lout],
                            preferred_element_type=jnp.float32)
    o_ref[...] = acc


def conv_block_forward(x, conv_w, conv_b, *, stride=1, padding=1):
    """x: (N, C_in, H, W) f32.  conv_w: (C_out, C_in, KH, KW).  conv_b: (C_out,).
    Returns (N, C_out, Ho, Wo) f32 == nn.Conv2d(stride=stride, padding=padding)."""
    # TODO(synk): groups_conv > 1 (grouped conv) not implemented; module default is groups=1.
    n, c_in, h, w = x.shape
    c_out, c_in_w, k_h, k_w = conv_w.shape
    assert c_in_w == c_in, "grouped convolution (groups_conv > 1) not supported"
    hp, wp = h + 2 * padding, w + 2 * padding
    ho = (hp - k_h) // stride + 1
    wo = (wp - k_w) // stride + 1
    n_taps = k_h * k_w
    max_off = (k_h - 1) * wp + (k_w - 1)

    vmem_limit, budget = _vmem_budget_bytes()
    b_imgs = _pick_images_per_step(n, c_in, c_out, hp, wp, max_off, budget)
    n_blocks = -(-n // b_imgs)
    n_pad = n_blocks * b_imgs

    lout = _round_up(b_imgs * hp * wp, 128)     # lane-dense output block (unmasked vst)
    lblk = _round_up(lout + max_off, 128)       # input block covers every tap shift

    # ---- wrapper layout plumbing: pad + ONE transpose (~1x input bytes) -----
    x_b = x.astype(jnp.bfloat16)
    x_b = jnp.pad(x_b, ((0, n_pad - n), (0, 0), (padding, padding), (padding, padding)))
    x_b = x_b.reshape(n_blocks, b_imgs, c_in, hp * wp)
    x_b = jnp.transpose(x_b, (2, 0, 1, 3))                      # (C_in, n_blocks, B, Hp*Wp)
    x_b = x_b.reshape(c_in, n_blocks, b_imgs * hp * wp)
    x_b = jnp.pad(x_b, ((0, 0), (0, 0), (0, lblk - b_imgs * hp * wp)))
    x_flat = x_b.reshape(c_in, n_blocks * lblk)                 # lane-dense bf16 slab

    # per-tap weights (n_taps, C_out, C_in) bf16; bias stays f32
    w_taps = jnp.transpose(conv_w.astype(jnp.bfloat16), (2, 3, 0, 1)).reshape(n_taps, c_out, c_in)
    b2d = conv_b.reshape(c_out, 1).astype(jnp.float32)

    kernel = partial(_conv_tap_kernel, n_taps=n_taps, k_w=k_w, wp=wp, lout=lout)

    flops = 2 * n * c_out * c_in * n_taps * ho * wo
    bytes_accessed = (c_in * n_blocks * lblk * 2          # x (bf16)
                      + n_taps * c_out * c_in * 2         # w (bf16)
                      + c_out * 4                         # bias
                      + c_out * n_blocks * lout * 4)      # out (f32)

    out_flat = pl.pallas_call(
        kernel,
        out_shape=jax.ShapeDtypeStruct((c_out, n_blocks * lout), jnp.float32),
        grid_spec=pltpu.PrefetchScalarGridSpec(
            num_scalar_prefetch=0,
            grid=(n_blocks,),
            in_specs=[
                pl.BlockSpec((n_taps, c_out, c_in), lambda i: (0, 0, 0)),  # weights (resident)
                pl.BlockSpec((c_out, 1), lambda i: (0, 0)),                # bias    (resident)
                pl.BlockSpec((c_in, lblk), lambda i: (0, i)),              # x slab  (lane-dense)
            ],
            out_specs=pl.BlockSpec((c_out, lout), lambda i: (0, i)),       # lane-dense output
        ),
        compiler_params=pltpu.CompilerParams(
            dimension_semantics=("parallel",),
            vmem_limit_bytes=vmem_limit),
        cost_estimate=pl.CostEstimate(flops=flops, transcendentals=0,
                                      bytes_accessed=bytes_accessed),
    )(w_taps, b2d, x_flat)

    # ---- drop garbage columns / padded images, back to NCHW -----------------
    out = out_flat.reshape(c_out, n_blocks, lout)[:, :, :b_imgs * hp * wp]
    out = out.reshape(c_out, n_pad, hp, wp)
    out = out[:, :n, 0:stride * (ho - 1) + 1:stride, 0:stride * (wo - 1) + 1:stride]
    return jnp.transpose(out, (1, 0, 2, 3))                # (N, C_out, Ho, Wo)


# ----------------------------------------------------------------------------
# pure-JAX reference (plain conv2d + bias) for the correctness check
# ----------------------------------------------------------------------------
def reference(x, conv_w, conv_b, *, stride=1, padding=1):
    y = jax.lax.conv_general_dilated(
        x, conv_w, window_strides=(stride, stride),
        padding=((padding, padding), (padding, padding)),
        dimension_numbers=('NCHW', 'OIHW', 'NCHW'))
    return y + conv_b[None, :, None, None]


if __name__ == "__main__":
    # ConvBlock(width=16, height=16, in_channels=4, out_channels=8, kernel_size=3, padding=1)
    N, C_in, C_out, H, W, K = 2, 4, 8, 16, 16, 3

    key = jax.random.PRNGKey(0)
    kx, kw_key, kb_key = jax.random.split(key, 3)
    x = jax.random.normal(kx, (N, C_in, H, W), dtype=jnp.float32)

    # deterministic parameter init (kaiming-uniform-ish bounds, like PyTorch defaults)
    fan_in = C_in * K * K
    bound = 1.0 / math.sqrt(fan_in)
    conv_w = jax.random.uniform(kw_key, (C_out, C_in, K, K), jnp.float32, -bound, bound)
    conv_b = jax.random.uniform(kb_key, (C_out,), jnp.float32, -bound, bound)

    fwd = jax.jit(partial(conv_block_forward, stride=1, padding=1))
    out = jax.block_until_ready(fwd(x, conv_w, conv_b))

    ref = jax.block_until_ready(reference(x, conv_w, conv_b, stride=1, padding=1))
    # bf16 MXU operands with f32 accumulation -> standard mixed-precision conv tolerance
    np.testing.assert_allclose(np.asarray(out), np.asarray(ref), rtol=1e-2, atol=1e-2)

    print("KERNEL_OK")
</pallas_src>

<mosaic_0001>
module attributes {stable_mosaic.version = 11 : i64} {
  func.func @_conv_tap_kernel(%arg0: i32, %arg1: memref<9x8x4xbf16, #tpu.memory_space<vmem>>, %arg2: memref<8x1xf32, #tpu.memory_space<vmem>>, %arg3: memref<4x896xbf16, #tpu.memory_space<vmem>>, %arg4: memref<8x768xf32, #tpu.memory_space<vmem>>) attributes {dimension_semantics = [#tpu.dimension_semantics<parallel>], iteration_bounds = array<i64: 1>, scalar_prefetch = 0 : i64, scratch_operands = 0 : i64, tpu.core_type = #tpu.core_type<tc>, window_params = [{pipeline_mode = #tpu.pipeline_mode<synchronous>, transform_indices = @transform_0, window_bounds = array<i64: 9, 8, 4>}, {pipeline_mode = #tpu.pipeline_mode<synchronous>, transform_indices = @transform_1, window_bounds = array<i64: 8, 1>}, {transform_indices = @transform_2, window_bounds = array<i64: 4, 896>}, {transform_indices = @transform_3, window_bounds = array<i64: 8, 768>}]} {
    %c0 = arith.constant 0 : index
    %c0_0 = arith.constant 0 : index
    %0 = vector.load %arg3[%c0, %c0_0] : memref<4x896xbf16, #tpu.memory_space<vmem>>, vector<4x896xbf16>
    %c0_1 = arith.constant 0 : index
    %c0_2 = arith.constant 0 : index
    %1 = vector.load %arg2[%c0_1, %c0_2] : memref<8x1xf32, #tpu.memory_space<vmem>>, vector<8x1xf32>
    %2 = vector.shape_cast %1 : vector<8x1xf32> to vector<8x1xf32>
    %3 = vector.broadcast %2 : vector<8x1xf32> to vector<8x768xf32>
    %c0_3 = arith.constant 0 : index
    %c0_4 = arith.constant 0 : index
    %c0_5 = arith.constant 0 : index
    %4 = vector.load %arg1[%c0_3, %c0_4, %c0_5] : memref<9x8x4xbf16, #tpu.memory_space<vmem>>, vector<1x8x4xbf16>
    %5 = vector.shape_cast %4 : vector<1x8x4xbf16> to vector<8x4xbf16>
    %6 = vector.extract_strided_slice %0 {offsets = [0, 0], sizes = [4, 768], strides = [1, 1]} : vector<4x896xbf16> to vector<4x768xbf16>
    %cst = arith.constant dense<0.000000e+00> : vector<8x768xf32>
    %7 = tpu.matmul %5, %6, %cst {dimension_numbers = #tpu.dot_dimension_numbers<[1], [0], [0], [1], [0, 0, 1, 1], [], []>} : vector<8x4xbf16>, vector<4x768xbf16>, vector<8x768xf32> -> vector<8x768xf32>
    %8 = arith.addf %3, %7 : vector<8x768xf32>
    %c1 = arith.constant 1 : index
    %c0_6 = arith.constant 0 : index
    %c0_7 = arith.constant 0 : index
    %9 = vector.load %arg1[%c1, %c0_6, %c0_7] : memref<9x8x4xbf16, #tpu.memory_space<vmem>>, vector<1x8x4xbf16>
    %10 = vector.shape_cast %9 : vector<1x8x4xbf16> to vector<8x4xbf16>
    %11 = vector.extract_strided_slice %0 {offsets = [0, 1], sizes = [4, 768], strides = [1, 1]} : vector<4x896xbf16> to vector<4x768xbf16>
    %cst_8 = arith.constant dense<0.000000e+00> : vector<8x768xf32>
    %12 = tpu.matmul %10, %11, %cst_8 {dimension_numbers = #tpu.dot_dimension_numbers<[1], [0], [0], [1], [0, 0, 1, 1], [], []>} : vector<8x4xbf16>, vector<4x768xbf16>, vector<8x768xf32> -> vector<8x768xf32>
    %13 = arith.addf %8, %12 : vector<8x768xf32>
    %c2 = arith.constant 2 : index
    %c0_9 = arith.constant 0 : index
    %c0_10 = arith.constant 0 : index
    %14 = vector.load %arg1[%c2, %c0_9, %c0_10] : memref<9x8x4xbf16, #tpu.memory_space<vmem>>, vector<1x8x4xbf16>
    %15 = vector.shape_cast %14 : vector<1x8x4xbf16> to vector<8x4xbf16>
    %16 = vector.extract_strided_slice %0 {offsets = [0, 2], sizes = [4, 768], strides = [1, 1]} : vector<4x896xbf16> to vector<4x768xbf16>
    %cst_11 = arith.constant dense<0.000000e+00> : vector<8x768xf32>
    %17 = tpu.matmul %15, %16, %cst_11 {dimension_numbers = #tpu.dot_dimension_numbers<[1], [0], [0], [1], [0, 0, 1, 1], [], []>} : vector<8x4xbf16>, vector<4x768xbf16>, vector<8x768xf32> -> vector<8x768xf32>
    %18 = arith.addf %13, %17 : vector<8x768xf32>
    %c3 = arith.constant 3 : index
    %c0_12 = arith.constant 0 : index
    %c0_13 = arith.constant 0 : index
    %19 = vector.load %arg1[%c3, %c0_12, %c0_13] : memref<9x8x4xbf16, #tpu.memory_space<vmem>>, vector<1x8x4xbf16>
    %20 = vector.shape_cast %19 : vector<1x8x4xbf16> to vector<8x4xbf16>
    %21 = vector.extract_strided_slice %0 {offsets = [0, 18], sizes = [4, 768], strides = [1, 1]} : vector<4x896xbf16> to vector<4x768xbf16>
    %cst_14 = arith.constant dense<0.000000e+00> : vector<8x768xf32>
    %22 = tpu.matmul %20, %21, %cst_14 {dimension_numbers = #tpu.dot_dimension_numbers<[1], [0], [0], [1], [0, 0, 1, 1], [], []>} : vector<8x4xbf16>, vector<4x768xbf16>, vector<8x768xf32> -> vector<8x768xf32>
    %23 = arith.addf %18, %22 : vector<8x768xf32>
    %c4 = arith.constant 4 : index
    %c0_15 = arith.constant 0 : index
    %c0_16 = arith.constant 0 : index
    %24 = vector.load %arg1[%c4, %c0_15, %c0_16] : memref<9x8x4xbf16, #tpu.memory_space<vmem>>, vector<1x8x4xbf16>
    %25 = vector.shape_cast %24 : vector<1x8x4xbf16> to vector<8x4xbf16>
    %26 = vector.extract_strided_slice %0 {offsets = [0, 19], sizes = [4, 768], strides = [1, 1]} : vector<4x896xbf16> to vector<4x768xbf16>
    %cst_17 = arith.constant dense<0.000000e+00> : vector<8x768xf32>
    %27 = tpu.matmul %25, %26, %cst_17 {dimension_numbers = #tpu.dot_dimension_numbers<[1], [0], [0], [1], [0, 0, 1, 1], [], []>} : vector<8x4xbf16>, vector<4x768xbf16>, vector<8x768xf32> -> vector<8x768xf32>
    %28 = arith.addf %23, %27 : vector<8x768xf32>
    %c5 = arith.constant 5 : index
    %c0_18 = arith.constant 0 : index
    %c0_19 = arith.constant 0 : index
    %29 = vector.load %arg1[%c5, %c0_18, %c0_19] : memref<9x8x4xbf16, #tpu.memory_space<vmem>>, vector<1x8x4xbf16>
    %30 = vector.shape_cast %29 : vector<1x8x4xbf16> to vector<8x4xbf16>
    %31 = vector.extract_strided_slice %0 {offsets = [0, 20], sizes = [4, 768], strides = [1, 1]} : vector<4x896xbf16> to vector<4x768xbf16>
    %cst_20 = arith.constant dense<0.000000e+00> : vector<8x768xf32>
    %32 = tpu.matmul %30, %31, %cst_20 {dimension_numbers = #tpu.dot_dimension_numbers<[1], [0], [0], [1], [0, 0, 1, 1], [], []>} : vector<8x4xbf16>, vector<4x768xbf16>, vector<8x768xf32> -> vector<8x768xf32>
    %33 = arith.addf %28, %32 : vector<8x768xf32>
    %c6 = arith.constant 6 : index
    %c0_21 = arith.constant 0 : index
    %c0_22 = arith.constant 0 : index
    %34 = vector.load %arg1[%c6, %c0_21, %c0_22] : memref<9x8x4xbf16, #tpu.memory_space<vmem>>, vector<1x8x4xbf16>
    %35 = vector.shape_cast %34 : vector<1x8x4xbf16> to vector<8x4xbf16>
    %36 = vector.extract_strided_slice %0 {offsets = [0, 36], sizes = [4, 768], strides = [1, 1]} : vector<4x896xbf16> to vector<4x768xbf16>
    %cst_23 = arith.constant dense<0.000000e+00> : vector<8x768xf32>
    %37 = tpu.matmul %35, %36, %cst_23 {dimension_numbers = #tpu.dot_dimension_numbers<[1], [0], [0], [1], [0, 0, 1, 1], [], []>} : vector<8x4xbf16>, vector<4x768xbf16>, vector<8x768xf32> -> vector<8x768xf32>
    %38 = arith.addf %33, %37 : vector<8x768xf32>
    %c7 = arith.constant 7 : index
    %c0_24 = arith.constant 0 : index
    %c0_25 = arith.constant 0 : index
    %39 = vector.load %arg1[%c7, %c0_24, %c0_25] : memref<9x8x4xbf16, #tpu.memory_space<vmem>>, vector<1x8x4xbf16>
    %40 = vector.shape_cast %39 : vector<1x8x4xbf16> to vector<8x4xbf16>
    %41 = vector.extract_strided_slice %0 {offsets = [0, 37], sizes = [4, 768], strides = [1, 1]} : vector<4x896xbf16> to vector<4x768xbf16>
    %cst_26 = arith.constant dense<0.000000e+00> : vector<8x768xf32>
    %42 = tpu.matmul %40, %41, %cst_26 {dimension_numbers = #tpu.dot_dimension_numbers<[1], [0], [0], [1], [0, 0, 1, 1], [], []>} : vector<8x4xbf16>, vector<4x768xbf16>, vector<8x768xf32> -> vector<8x768xf32>
    %43 = arith.addf %38, %42 : vector<8x768xf32>
    %c8 = arith.constant 8 : index
    %c0_27 = arith.constant 0 : index
    %c0_28 = arith.constant 0 : index
    %44 = vector.load %arg1[%c8, %c0_27, %c0_28] : memref<9x8x4xbf16, #tpu.memory_space<vmem>>, vector<1x8x4xbf16>
    %45 = vector.shape_cast %44 : vector<1x8x4xbf16> to vector<8x4xbf16>
    %46 = vector.extract_strided_slice %0 {offsets = [0, 38], sizes = [4, 768], strides = [1, 1]} : vector<4x896xbf16> to vector<4x768xbf16>
    %cst_29 = arith.constant dense<0.000000e+00> : vector<8x768xf32>
    %47 = tpu.matmul %45, %46, %cst_29 {dimension_numbers = #tpu.dot_dimension_numbers<[1], [0], [0], [1], [0, 0, 1, 1], [], []>} : vector<8x4xbf16>, vector<4x768xbf16>, vector<8x768xf32> -> vector<8x768xf32>
    %48 = arith.addf %43, %47 : vector<8x768xf32>
    %c0_30 = arith.constant 0 : index
    %c0_31 = arith.constant 0 : index
    %49 = vector.load %arg4[%c0_30, %c0_31] : memref<8x768xf32, #tpu.memory_space<vmem>>, vector<8x768xf32>
    tpu.vector_store %arg4[%c0_30, %c0_31], %48 {strides = array<i32>} : memref<8x768xf32, #tpu.memory_space<vmem>>, vector<8x768xf32>,
    return
  }
  func.func @transform_0(%arg0: i32) -> (i32, i32, i32) {
    %c0_i32 = arith.constant 0 : i32
    %c0_i32_0 = arith.constant 0 : i32
    %c0_i32_1 = arith.constant 0 : i32
    %c0_i32_2 = arith.constant 0 : i32
    return %c0_i32, %c0_i32_0, %c0_i32_1 : i32, i32, i32
  }
  func.func @transform_1(%arg0: i32) -> (i32, i32) {
    %c0_i32 = arith.constant 0 : i32
    %c0_i32_0 = arith.constant 0 : i32
    %c0_i32_1 = arith.constant 0 : i32
    return %c0_i32, %c0_i32_0 : i32, i32
  }
  func.func @transform_2(%arg0: i32) -> (i32, i32) {
    %c0_i32 = arith.constant 0 : i32
    %c0_i32_0 = arith.constant 0 : i32
    return %c0_i32, %arg0 : i32, i32
  }
  func.func @transform_3(%arg0: i32) -> (i32, i32) {
    %c0_i32 = arith.constant 0 : i32
    %c0_i32_0 = arith.constant 0 : i32
    return %c0_i32, %arg0 : i32, i32
  }
}

</mosaic_0001>

<llo_original>
// kernel: conv_block_forward.1
$region0: #{conv_block_forward.1}
  #allocation0 [shape = 'u32[]', space=smem, size = 0x4, offset = 0x4, fixed_abs, tag = 'smem constant byte address 0x4 - core index']
  #allocation1 [shape = 'u32[144,128]{1,0:T(1,128)}', space=vmem, size = 0x12000, scoped, tag = 'internal scratch']
  %s0 = inlined_call_operand.vmem [shape: bf16[9,8,4], index: 0, kind: input, shape index: {}]
  %s1 = inlined_call_operand.vmem [shape: f32[8,1], index: 1, kind: input, shape index: {}]
  %s2 = inlined_call_operand.vmem [shape: bf16[4,896], index: 2, kind: input, shape index: {}]
  %s3 = inlined_call_operand.vmem [shape: f32[8,768], index: 3, kind: output, shape index: {}]
  %s4 = sld [smem:[#allocation0]]
  $region22: #{conv_block_forward.1} parent=0
    _
  %s6 = ssub.s32 1, %s4
  %s7 = scalar_select 0, %s6, %s4
  // Predicated region
  $region2: #{conv_block_forward.1} parent=0 // pred_check
    _
  $region3: #{conv_block_forward.1} parent=0 // pred_check_branch
    %9 = sbr.rel (0) target = $region5
  $region4: #{conv_block_forward.1} parent=0 // pred_region
    _
  $region5: #{conv_block_forward.1} parent=0 // pred_fallthru
    _
  // Predicated region
  $region6: #{conv_block_forward.1} parent=0 // pred_check
    _
  $region7: #{conv_block_forward.1} parent=0 // pred_check_branch
    %11 = sbr.rel (0) target = $region9
  $region8: #{conv_block_forward.1} parent=0 // pred_region
    _
  $region9: #{conv_block_forward.1} parent=0 // pred_fallthru
    _
  // Predicated region
  $region10: #{conv_block_forward.1} parent=0 // pred_check
    _
  $region11: #{conv_block_forward.1} parent=0 // pred_check_branch
    %13 = sbr.rel (0) target = $region13
  $region12: #{conv_block_forward.1} parent=0 // pred_region
    _
  $region13: #{conv_block_forward.1} parent=0 // pred_fallthru
    _
  %v15 = vld [vmem:[%s2] sm:$0xff]
  %v16 = vld [vmem:[%s2 + $0x8] sm:$0x3f]
  %v17 = vld [vmem:[%s1] sm:$0xff]
  %19 = vset.pattern.permute.xlu0 0
  %20 = vperm.xlu0 %19, %v17
  %v21 = vpop.permute.xlu0 %20
  %v23 = vld [vmem:[%s0] sm:$0xf]
  %v26 = vcombine.high %v15, %v15
  %v28 = vunpack.c.l.s4 1983009808
  %v29 = vunpack.c.0.s8 %v28
  %v30 = vlaneseq
  %v31 = vshrl.u32 %v30, 7
  %v32 = vsub.s32 %v29, %v31
  %v33 = vrot.slane %v15, %v32
  %v35 = vunpack.c.l.s4 1983009808
  %v36 = vunpack.c.0.s8 %v35
  %v37 = vlaneseq
  %v38 = vshrl.u32 %v37, 7
  %v39 = vsub.s32 %v36, %v38
  %v40 = vrot.slane %v26, %v39
  %v41 = vcombine.high %v33, %v33
  %v42 = vcombine.high %v40, %v40
  %v44 = vunpack.c.l.s4 1983009808
  %v45 = vunpack.c.0.s8 %v44
  %v46 = vlaneseq
  %v47 = vshrl.u32 %v46, 7
  %v48 = vsub.s32 %v45, %v47
  %v49 = vrot.slane %v16, %v48
  %v50 = vcombine.high %v49, %v49
  %vm51 = vcmask 31744
  %v53 = vsel %vm51, %v23, 0
  %vm55 = vcmask 1041408
  %v57 = vsel %vm55, %v33, 0
  %v60 = vsel %vm55, %v41, 0
  %v63 = vsel %vm55, %v40, 0
  %v66 = vsel %vm55, %v42, 0
  %v69 = vsel %vm55, %v49, 0
  %v72 = vsel %vm55, %v50, 0
  %74 = vmatprep.subr.bf16.mxu0 %v60
  %75 = vmatpush1.bf16.msra.mxu0 %v57
  %76 = vmatprep.subr.bf16.mxu0 0
  %77 = vmatpush1.bf16.msra.mxu0 0
  %78 = vmatprep.subr.bf16.mxu0 0
  %79 = vmatpush1.bf16.msra.mxu0 0
  %80 = vmatprep.subr.bf16.mxu0 0
  %81 = vmatpush1.bf16.msra.mxu0 0
  %82 = vmatprep.subr.bf16.mxu0 0
  %83 = vmatpush1.bf16.msra.mxu0 0
  %84 = vmatprep.subr.bf16.mxu0 0
  %85 = vmatpush1.bf16.msra.mxu0 0
  %86 = vmatprep.subr.bf16.mxu0 0
  %87 = vmatpush1.bf16.msra.mxu0 0
  %88 = vmatprep.subr.bf16.mxu0 0
  %89 = vmatpush1.bf16.msra.mxu0 0
  %90 = vmatprep.subr.bf16.mxu0 0
  %91 = vmatpush1.bf16.msra.mxu0 0
  %92 = vmatprep.subr.bf16.mxu0 0
  %93 = vmatpush1.bf16.msra.mxu0 0
  %94 = vmatprep.subr.bf16.mxu0 0
  %95 = vmatpush1.bf16.msra.mxu0 0
  %96 = vmatprep.subr.bf16.mxu0 0
  %97 = vmatpush1.bf16.msra.mxu0 0
  %98 = vmatprep.subr.bf16.mxu0 0
  %99 = vmatpush1.bf16.msra.mxu0 0
  %100 = vmatprep.subr.bf16.mxu0 0
  %101 = vmatpush1.bf16.msra.mxu0 0
  %102 = vmatprep.subr.bf16.mxu0 0
  %103 = vmatpush1.bf16.msra.mxu0 0
  %104 = vmatprep.subr.bf16.mxu0 0
  %105 = vmatpush1.bf16.msra.mxu0 0
  %106 = vmatprep.mubr.bf16.mxu0 0
  %107 = vmatmul.mubr.bf16.gmra.mrb[0].mxu0 %v53
  %v108 = vpop.f32.mrb[0].mxu0
  %v109 = vadd.f32 0.0, %v108
  %v110 = vpop.f32.mrb[0].mxu0
  %v111 = vadd.f32 0.0, %v110
  %v112 = vpop.f32.mrb[0].mxu0
  %v113 = vpop.f32.mrb[0].mxu0
  %114 = vdwg.mxu0
  %115 = vmatprep.subr.bf16.mxu0 %v66
  %116 = vmatpush1.bf16.msra.mxu0 %v63
  %117 = vmatprep.subr.bf16.mxu0 0
  %118 = vmatpush1.bf16.msra.mxu0 0
  %119 = vmatprep.subr.bf16.mxu0 0
  %120 = vmatpush1.bf16.msra.mxu0 0
  %121 = vmatprep.subr.bf16.mxu0 0
  %122 = vmatpush1.bf16.msra.mxu0 0
  %123 = vmatprep.subr.bf16.mxu0 0
  %124 = vmatpush1.bf16.msra.mxu0 0
  %125 = vmatprep.subr.bf16.mxu0 0
  %126 = vmatpush1.bf16.msra.mxu0 0
  %127 = vmatprep.subr.bf16.mxu0 0
  %128 = vmatpush1.bf16.msra.mxu0 0
  %129 = vmatprep.subr.bf16.mxu0 0
  %130 = vmatpush1.bf16.msra.mxu0 0
  %131 = vmatprep.subr.bf16.mxu0 0
  %132 = vmatpush1.bf16.msra.mxu0 0
  %133 = vmatprep.subr.bf16.mxu0 0
  %134 = vmatpush1.bf16.msra.mxu0 0
  %135 = vmatprep.subr.bf16.mxu0 0
  %136 = vmatpush1.bf16.msra.mxu0 0
  %137 = vmatprep.subr.bf16.mxu0 0
  %138 = vmatpush1.bf16.msra.mxu0 0
  %139 = vmatprep.subr.bf16.mxu0 0
  %140 = vmatpush1.bf16.msra.mxu0 0
  %141 = vmatprep.subr.bf16.mxu0 0
  %142 = vmatpush1.bf16.msra.mxu0 0
  %143 = vmatprep.subr.bf16.mxu0 0
  %144 = vmatpush1.bf16.msra.mxu0 0
  %145 = vmatprep.subr.bf16.mxu0 0
  %146 = vmatpush1.bf16.msra.mxu0 0
  %147 = vmatprep.mubr.bf16.mxu0 0
  %148 = vmatmul.mubr.bf16.gmra.mrb[0].mxu0 %v53
  %v149 = vpop.f32.mrb[0].mxu0
  %v150 = vadd.f32 0.0, %v149
  %v151 = vpop.f32.mrb[0].mxu0
  %v152 = vadd.f32 0.0, %v151
  %v153 = vpop.f32.mrb[0].mxu0
  %v154 = vpop.f32.mrb[0].mxu0
  %155 = vdwg.mxu0
  %156 = vmatprep.subr.bf16.mxu0 %v72
  %157 = vmatpush1.bf16.msra.mxu0 %v69
  %158 = vmatprep.subr.bf16.mxu0 0
  %159 = vmatpush1.bf16.msra.mxu0 0
  %160 = vmatprep.subr.bf16.mxu0 0
  %161 = vmatpush1.bf16.msra.mxu0 0
  %162 = vmatprep.subr.bf16.mxu0 0
  %163 = vmatpush1.bf16.msra.mxu0 0
  %164 = vmatprep.subr.bf16.mxu0 0
  %165 = vmatpush1.bf16.msra.mxu0 0
  %166 = vmatprep.subr.bf16.mxu0 0
  %167 = vmatpush1.bf16.msra.mxu0 0
  %168 = vmatprep.subr.bf16.mxu0 0
  %169 = vmatpush1.bf16.msra.mxu0 0
  %170 = vmatprep.subr.bf16.mxu0 0
  %171 = vmatpush1.bf16.msra.mxu0 0
  %172 = vmatprep.subr.bf16.mxu0 0
  %173 = vmatpush1.bf16.msra.mxu0 0
  %174 = vmatprep.subr.bf16.mxu0 0
  %175 = vmatpush1.bf16.msra.mxu0 0
  %176 = vmatprep.subr.bf16.mxu0 0
  %177 = vmatpush1.bf16.msra.mxu0 0
  %178 = vmatprep.subr.bf16.mxu0 0
  %179 = vmatpush1.bf16.msra.mxu0 0
  %180 = vmatprep.subr.bf16.mxu0 0
  %181 = vmatpush1.bf16.msra.mxu0 0
  %182 = vmatprep.subr.bf16.mxu0 0
  %183 = vmatpush1.bf16.msra.mxu0 0
  %184 = vmatprep.subr.bf16.mxu0 0
  %185 = vmatpush1.bf16.msra.mxu0 0
  %186 = vmatprep.subr.bf16.mxu0 0
  %187 = vmatpush1.bf16.msra.mxu0 0
  %188 = vmatprep.mubr.bf16.mxu0 0
  %189 = vmatmul.mubr.bf16.gmra.mrb[0].mxu0 %v53
  %v190 = vpop.f32.mrb[0].mxu0
  %v191 = vadd.f32 0.0, %v190
  %v192 = vpop.f32.mrb[0].mxu0
  %v193 = vadd.f32 0.0, %v192
  %v194 = vpop.f32.mrb[0].mxu0
  %v195 = vpop.f32.mrb[0].mxu0
  %196 = vdwg.mxu0
  %v197 = vadd.f32 %v21, %v109
  %v198 = vadd.f32 %v21, %v111
  %v199 = vadd.f32 %v21, %v150
  %v200 = vadd.f32 %v21, %v152
  %v201 = vadd.f32 %v21, %v191
  %v202 = vadd.f32 %v21, %v193
  %s203 = scalar_lea.vmem %s0, 4
  %v204 = vld [vmem:[%s203] sm:$0xf]
  %v205 = vcombine.high %v16, %v16
  %v207 = vunpack.c.l.s4 1983009808
  %v208 = vunpack.c.0.s8 %v207
  %v209 = vlaneseq
  %v210 = vshrl.u32 %v209, 7
  %v211 = vsub.s32 %v208, %v210
  %v212 = vrot.slane %v205, %v211
  %213 = vrot.lane.b32.xlu0 %v33, 127
  %v214 = vpop.permute.xlu0 %213
  %215 = vrot.lane.b32.xlu0 %v41, 127
  %v216 = vpop.permute.xlu0 %215
  %217 = vrot.lane.b32.xlu0 %v40, 127
  %v218 = vpop.permute.xlu0 %217
  %219 = vrot.lane.b32.xlu0 %v42, 127
  %v220 = vpop.permute.xlu0 %219
  %221 = vrot.lane.b32.xlu0 %v49, 127
  %v222 = vpop.permute.xlu0 %221
  %223 = vrot.lane.b32.xlu0 %v50, 127
  %v224 = vpop.permute.xlu0 %223
  %225 = vrot.lane.b32.xlu0 %v212, 127
  %v226 = vpop.permute.xlu0 %225
  %vm227 = vcmask 1039360
  %v228 = vsel %vm227, %v214, %v216
  %v229 = vsel %vm227, %v216, %v218
  %v230 = vsel %vm227, %v218, %v220
  %v231 = vsel %vm227, %v220, %v222
  %v232 = vsel %vm227, %v222, %v224
  %v233 = vsel %vm227, %v224, %v226
  %v235 = vsel %vm51, %v204, 0
  %v238 = vsel %vm55, %v228, 0
  %v241 = vsel %vm55, %v229, 0
  %v244 = vsel %vm55, %v230, 0
  %v247 = vsel %vm55, %v231, 0
  %v250 = vsel %vm55, %v232, 0
  %v253 = vsel %vm55, %v233, 0
  %255 = vmatprep.subr.bf16.mxu0 %v241
  %256 = vmatpush1.bf16.msra.mxu0 %v238
  %257 = vmatprep.subr.bf16.mxu0 0
  %258 = vmatpush1.bf16.msra.mxu0 0
  %259 = vmatprep.subr.bf16.mxu0 0
  %260 = vmatpush1.bf16.msra.mxu0 0
  %261 = vmatprep.subr.bf16.mxu0 0
  %262 = vmatpush1.bf16.msra.mxu0 0
  %263 = vmatprep.subr.bf16.mxu0 0
  %264 = vmatpush1.bf16.msra.mxu0 0
  %265 = vmatprep.subr.bf16.mxu0 0
  %266 = vmatpush1.bf16.msra.mxu0 0
  %267 = vmatprep.subr.bf16.mxu0 0
  %268 = vmatpush1.bf16.msra.mxu0 0
  %269 = vmatprep.subr.bf16.mxu0 0
  %270 = vmatpush1.bf16.msra.mxu0 0
  %271 = vmatprep.subr.bf16.mxu0 0
  %272 = vmatpush1.bf16.msra.mxu0 0
  %273 = vmatprep.subr.bf16.mxu0 0
  %274 = vmatpush1.bf16.msra.mxu0 0
  %275 = vmatprep.subr.bf16.mxu0 0
  %276 = vmatpush1.bf16.msra.mxu0 0
  %277 = vmatprep.subr.bf16.mxu0 0
  %278 = vmatpush1.bf16.msra.mxu0 0
  %279 = vmatprep.subr.bf16.mxu0 0
  %280 = vmatpush1.bf16.msra.mxu0 0
  %281 = vmatprep.subr.bf16.mxu0 0
  %282 = vmatpush1.bf16.msra.mxu0 0
  %283 = vmatprep.subr.bf16.mxu0 0
  %284 = vmatpush1.bf16.msra.mxu0 0
  %285 = vmatprep.subr.bf16.mxu0 0
  %286 = vmatpush1.bf16.msra.mxu0 0
  %287 = vmatprep.mubr.bf16.mxu0 0
  %288 = vmatmul.mubr.bf16.gmra.mrb[0].mxu0 %v235
  %v289 = vpop.f32.mrb[0].mxu0
  %v290 = vadd.f32 0.0, %v289
  %v291 = vpop.f32.mrb[0].mxu0
  %v292 = vadd.f32 0.0, %v291
  %v293 = vpop.f32.mrb[0].mxu0
  %v294 = vpop.f32.mrb[0].mxu0
  %295 = vdwg.mxu0
  %296 = vmatprep.subr.bf16.mxu0 %v247
  %297 = vmatpush1.bf16.msra.mxu0 %v244
  %298 = vmatprep.subr.bf16.mxu0 0
  %299 = vmatpush1.bf16.msra.mxu0 0
  %300 = vmatprep.subr.bf16.mxu0 0
  %301 = vmatpush1.bf16.msra.mxu0 0
  %302 = vmatprep.subr.bf16.mxu0 0
  %303 = vmatpush1.bf16.msra.mxu0 0
  %304 = vmatprep.subr.bf16.mxu0 0
  %305 = vmatpush1.bf16.msra.mxu0 0
  %306 = vmatprep.subr.bf16.mxu0 0
  %307 = vmatpush1.bf16.msra.mxu0 0
  %308 = vmatprep.subr.bf16.mxu0 0
  %309 = vmatpush1.bf16.msra.mxu0 0
  %310 = vmatprep.subr.bf16.mxu0 0
  %311 = vmatpush1.bf16.msra.mxu0 0
  %312 = vmatprep.subr.bf16.mxu0 0
  %313 = vmatpush1.bf16.msra.mxu0 0
  %314 = vmatprep.subr.bf16.mxu0 0
  %315 = vmatpush1.bf16.msra.mxu0 0
  %316 = vmatprep.subr.bf16.mxu0 0
  %317 = vmatpush1.bf16.msra.mxu0 0
  %318 = vmatprep.subr.bf16.mxu0 0
  %319 = vmatpush1.bf16.msra.mxu0 0
  %320 = vmatprep.subr.bf16.mxu0 0
  %321 = vmatpush1.bf16.msra.mxu0 0
  %322 = vmatprep.subr.bf16.mxu0 0
  %323 = vmatpush1.bf16.msra.mxu0 0
  %324 = vmatprep.subr.bf16.mxu0 0
  %325 = vmatpush1.bf16.msra.mxu0 0
  %326 = vmatprep.subr.bf16.mxu0 0
  %327 = vmatpush1.bf16.msra.mxu0 0
  %328 = vmatprep.mubr.bf16.mxu0 0
  %329 = vmatmul.mubr.bf16.gmra.mrb[0].mxu0 %v235
  %v330 = vpop.f32.mrb[0].mxu0
  %v331 = vadd.f32 0.0, %v330
  %v332 = vpop.f32.mrb[0].mxu0
  %v333 = vadd.f32 0.0, %v332
  %v334 = vpop.f32.mrb[0].mxu0
  %v335 = vpop.f32.mrb[0].mxu0
  %336 = vdwg.mxu0
  %337 = vmatprep.subr.bf16.mxu0 %v253
  %338 = vmatpush1.bf16.msra.mxu0 %v250
  %339 = vmatprep.subr.bf16.mxu0 0
  %340 = vmatpush1.bf16.msra.mxu0 0
  %341 = vmatprep.subr.bf16.mxu0 0
  %342 = vmatpush1.bf16.msra.mxu0 0
  %343 = vmatprep.subr.bf16.mxu0 0
  %344 = vmatpush1.bf16.msra.mxu0 0
  %345 = vmatprep.subr.bf16.mxu0 0
  %346 = vmatpush1.bf16.msra.mxu0 0
  %347 = vmatprep.subr.bf16.mxu0 0
  %348 = vmatpush1.bf16.msra.mxu0 0
  %349 = vmatprep.subr.bf16.mxu0 0
  %350 = vmatpush1.bf16.msra.mxu0 0
  %351 = vmatprep.subr.bf16.mxu0 0
  %352 = vmatpush1.bf16.msra.mxu0 0
  %353 = vmatprep.subr.bf16.mxu0 0
  %354 = vmatpush1.bf16.msra.mxu0 0
  %355 = vmatprep.subr.bf16.mxu0 0
  %356 = vmatpush1.bf16.msra.mxu0 0
  %357 = vmatprep.subr.bf16.mxu0 0
  %358 = vmatpush1.bf16.msra.mxu0 0
  %359 = vmatprep.subr.bf16.mxu0 0
  %360 = vmatpush1.bf16.msra.mxu0 0
  %361 = vmatprep.subr.bf16.mxu0 0
  %362 = vmatpush1.bf16.msra.mxu0 0
  %363 = vmatprep.subr.bf16.mxu0 0
  %364 = vmatpush1.bf16.msra.mxu0 0
  %365 = vmatprep.subr.bf16.mxu0 0
  %366 = vmatpush1.bf16.msra.mxu0 0
  %367 = vmatprep.subr.bf16.mxu0 0
  %368 = vmatpush1.bf16.msra.mxu0 0
  %369 = vmatprep.mubr.bf16.mxu0 0
  %370 = vmatmul.mubr.bf16.gmra.mrb[0].mxu0 %v235
  %v371 = vpop.f32.mrb[0].mxu0
  %v372 = vadd.f32 0.0, %v371
  %v373 = vpop.f32.mrb[0].mxu0
  %v374 = vadd.f32 0.0, %v373
  %v375 = vpop.f32.mrb[0].mxu0
  %v376 = vpop.f32.mrb[0].mxu0
  %377 = vdwg.mxu0
  %v378 = vadd.f32 %v197, %v290
  %v379 = vadd.f32 %v198, %v292
  %v380 = vadd.f32 %v199, %v331
  %v381 = vadd.f32 %v200, %v333
  %v382 = vadd.f32 %v201, %v372
  %v383 = vadd.f32 %v202, %v374
  %s384 = scalar_lea.vmem %s0, 8
  %v385 = vld [vmem:[%s384] sm:$0xf]
  %386 = vrot.lane.b32.xlu0 %v33, 126
  %v387 = vpop.permute.xlu0 %386
  %388 = vrot.lane.b32.xlu0 %v41, 126
  %v389 = vpop.permute.xlu0 %388
  %390 = vrot.lane.b32.xlu0 %v40, 126
  %v391 = vpop.permute.xlu0 %390
  %392 = vrot.lane.b32.xlu0 %v42, 126
  %v393 = vpop.permute.xlu0 %392
  %394 = vrot.lane.b32.xlu0 %v49, 126
  %v395 = vpop.permute.xlu0 %394
  %396 = vrot.lane.b32.xlu0 %v50, 126
  %v397 = vpop.permute.xlu0 %396
  %398 = vrot.lane.b32.xlu0 %v212, 126
  %v399 = vpop.permute.xlu0 %398
  %vm400 = vcmask 1031168
  %v401 = vsel %vm400, %v387, %v389
  %v402 = vsel %vm400, %v389, %v391
  %v403 = vsel %vm400, %v391, %v393
  %v404 = vsel %vm400, %v393, %v395
  %v405 = vsel %vm400, %v395, %v397
  %v406 = vsel %vm400, %v397, %v399
  %v408 = vsel %vm51, %v385, 0
  %v411 = vsel %vm55, %v401, 0
  %v414 = vsel %vm55, %v402, 0
  %v417 = vsel %vm55, %v403, 0
  %v420 = vsel %vm55, %v404, 0
  %v423 = vsel %vm55, %v405, 0
  %v426 = vsel %vm55, %v406, 0
  %428 = vmatprep.subr.bf16.mxu0 %v414
  %429 = vmatpush1.bf16.msra.mxu0 %v411
  %430 = vmatprep.subr.bf16.mxu0 0
  %431 = vmatpush1.bf16.msra.mxu0 0
  %432 = vmatprep.subr.bf16.mxu0 0
  %433 = vmatpush1.bf16.msra.mxu0 0
  %434 = vmatprep.subr.bf16.mxu0 0
  %435 = vmatpush1.bf16.msra.mxu0 0
  %436 = vmatprep.subr.bf16.mxu0 0
  %437 = vmatpush1.bf16.msra.mxu0 0
  %438 = vmatprep.subr.bf16.mxu0 0
  %439 = vmatpush1.bf16.msra.mxu0 0
  %440 = vmatprep.subr.bf16.mxu0 0
  %441 = vmatpush1.bf16.msra.mxu0 0
  %442 = vmatprep.subr.bf16.mxu0 0
  %443 = vmatpush1.bf16.msra.mxu0 0
  %444 = vmatprep.subr.bf16.mxu0 0
  %445 = vmatpush1.bf16.msra.mxu0 0
  %446 = vmatprep.subr.bf16.mxu0 0
  %447 = vmatpush1.bf16.msra.mxu0 0
  %448 = vmatprep.subr.bf16.mxu0 0
  %449 = vmatpush1.bf16.msra.mxu0 0
  %450 = vmatprep.subr.bf16.mxu0 0
  %451 = vmatpush1.bf16.msra.mxu0 0
  %452 = vmatprep.subr.bf16.mxu0 0
  %453 = vmatpush1.bf16.msra.mxu0 0
  %454 = vmatprep.subr.bf16.mxu0 0
  %455 = vmatpush1.bf16.msra.mxu0 0
  %456 = vmatprep.subr.bf16.mxu0 0
  %457 = vmatpush1.bf16.msra.mxu0 0
  %458 = vmatprep.subr.bf16.mxu0 0
  %459 = vmatpush1.bf16.msra.mxu0 0
  %460 = vmatprep.mubr.bf16.mxu0 0
  %461 = vmatmul.mubr.bf16.gmra.mrb[0].mxu0 %v408
  %v462 = vpop.f32.mrb[0].mxu0
  %v463 = vadd.f32 0.0, %v462
  %v464 = vpop.f32.mrb[0].mxu0
  %v465 = vadd.f32 0.0, %v464
  %v466 = vpop.f32.mrb[0].mxu0
  %v467 = vpop.f32.mrb[0].mxu0
  %468 = vdwg.mxu0
  %469 = vmatprep.subr.bf16.mxu0 %v420
  %470 = vmatpush1.bf16.msra.mxu0 %v417
  %471 = vmatprep.subr.bf16.mxu0 0
  %472 = vmatpush1.bf16.msra.mxu0 0
  %473 = vmatprep.subr.bf16.mxu0 0
  %474 = vmatpush1.bf16.msra.mxu0 0
  %475 = vmatprep.subr.bf16.mxu0 0
  %476 = vmatpush1.bf16.msra.mxu0 0
  %477 = vmatprep.subr.bf16.mxu0 0
  %478 = vmatpush1.bf16.msra.mxu0 0
  %479 = vmatprep.subr.bf16.mxu0 0
  %480 = vmatpush1.bf16.msra.mxu0 0
  %481 = vmatprep.subr.bf16.mxu0 0
  %482 = vmatpush1.bf16.msra.mxu0 0
  %483 = vmatprep.subr.bf16.mxu0 0
  %484 = vmatpush1.bf16.msra.mxu0 0
  %485 = vmatprep.subr.bf16.mxu0 0
  %486 = vmatpush1.bf16.msra.mxu0 0
  %487 = vmatprep.subr.bf16.mxu0 0
  %488 = vmatpush1.bf16.msra.mxu0 0
  %489 = vmatprep.subr.bf16.mxu0 0
  %490 = vmatpush1.bf16.msra.mxu0 0
  %491 = vmatprep.subr.bf16.mxu0 0
  %492 = vmatpush1.bf16.msra.mxu0 0
  %493 = vmatprep.subr.bf16.mxu0 0
  %494 = vmatpush1.bf16.msra.mxu0 0
  %495 = vmatprep.subr.bf16.mxu0 0
  %496 = vmatpush1.bf16.msra.mxu0 0
  %497 = vmatprep.subr.bf16.mxu0 0
  %498 = vmatpush1.bf16.msra.mxu0 0
  %499 = vmatprep.subr.bf16.mxu0 0
  %500 = vmatpush1.bf16.msra.mxu0 0
  %501 = vmatprep.mubr.bf16.mxu0 0
  %502 = vmatmul.mubr.bf16.gmra.mrb[0].mxu0 %v408
  %v503 = vpop.f32.mrb[0].mxu0
  %v504 = vadd.f32 0.0, %v503
  %v505 = vpop.f32.mrb[0].mxu0
  %v506 = vadd.f32 0.0, %v505
  %v507 = vpop.f32.mrb[0].mxu0
  %v508 = vpop.f32.mrb[0].mxu0
  %509 = vdwg.mxu0
  %510 = vmatprep.subr.bf16.mxu0 %v426
  %511 = vmatpush1.bf16.msra.mxu0 %v423
  %512 = vmatprep.subr.bf16.mxu0 0
  %513 = vmatpush1.bf16.msra.mxu0 0
  %514 = vmatprep.subr.bf16.mxu0 0
  %515 = vmatpush1.bf16.msra.mxu0 0
  %516 = vmatprep.subr.bf16.mxu0 0
  %517 = vmatpush1.bf16.msra.mxu0 0
  %518 = vmatprep.subr.bf16.mxu0 0
  %519 = vmatpush1.bf16.msra.mxu0 0
  %520 = vmatprep.subr.bf16.mxu0 0
  %521 = vmatpush1.bf16.msra.mxu0 0
  %522 = vmatprep.subr.bf16.mxu0 0
  %523 = vmatpush1.bf16.msra.mxu0 0
  %524 = vmatprep.subr.bf16.mxu0 0
  %525 = vmatpush1.bf16.msra.mxu0 0
  %526 = vmatprep.subr.bf16.mxu0 0
  %527 = vmatpush1.bf16.msra.mxu0 0
  %528 = vmatprep.subr.bf16.mxu0 0
  %529 = vmatpush1.bf16.msra.mxu0 0
  %530 = vmatprep.subr.bf16.mxu0 0
  %531 = vmatpush1.bf16.msra.mxu0 0
  %532 = vmatprep.subr.bf16.mxu0 0
  %533 = vmatpush1.bf16.msra.mxu0 0
  %534 = vmatprep.subr.bf16.mxu0 0
  %535 = vmatpush1.bf16.msra.mxu0 0
  %536 = vmatprep.subr.bf16.mxu0 0
  %537 = vmatpush1.bf16.msra.mxu0 0
  %538 = vmatprep.subr.bf16.mxu0 0
  %539 = vmatpush1.bf16.msra.mxu0 0
  %540 = vmatprep.subr.bf16.mxu0 0
  %541 = vmatpush1.bf16.msra.mxu0 0
  %542 = vmatprep.mubr.bf16.mxu0 0
  %543 = vmatmul.mubr.bf16.gmra.mrb[0].mxu0 %v408
  %v544 = vpop.f32.mrb[0].mxu0
  %v545 = vadd.f32 0.0, %v544
  %v546 = vpop.f32.mrb[0].mxu0
  %v547 = vadd.f32 0.0, %v546
  %v548 = vpop.f32.mrb[0].mxu0
  %v549 = vpop.f32.mrb[0].mxu0
  %550 = vdwg.mxu0
  %v551 = vadd.f32 %v378, %v463
  %v552 = vadd.f32 %v379, %v465
  %v553 = vadd.f32 %v380, %v504
  %v554 = vadd.f32 %v381, %v506
  %v555 = vadd.f32 %v382, %v545
  %v556 = vadd.f32 %v383, %v547
  %s557 = scalar_lea.vmem %s0, 12
  %v558 = vld [vmem:[%s557] sm:$0xf]
  %559 = vrot.lane.b32.xlu0 %v33, 110
  %v560 = vpop.permute.xlu0 %559
  %561 = vrot.lane.b32.xlu0 %v41, 110
  %v562 = vpop.permute.xlu0 %561
  %563 = vrot.lane.b32.xlu0 %v40, 110
  %v564 = vpop.permute.xlu0 %563
  %565 = vrot.lane.b32.xlu0 %v42, 110
  %v566 = vpop.permute.xlu0 %565
  %567 = vrot.lane.b32.xlu0 %v49, 110
  %v568 = vpop.permute.xlu0 %567
  %569 = vrot.lane.b32.xlu0 %v50, 110
  %v570 = vpop.permute.xlu0 %569
  %571 = vrot.lane.b32.xlu0 %v212, 110
  %v572 = vpop.permute.xlu0 %571
  %vm573 = vcmask 900096
  %v574 = vsel %vm573, %v560, %v562
  %v575 = vsel %vm573, %v562, %v564
  %v576 = vsel %vm573, %v564, %v566
  %v577 = vsel %vm573, %v566, %v568
  %v578 = vsel %vm573, %v568, %v570
  %v579 = vsel %vm573, %v570, %v572
  %v581 = vsel %vm51, %v558, 0
  %v584 = vsel %vm55, %v574, 0
  %v587 = vsel %vm55, %v575, 0
  %v590 = vsel %vm55, %v576, 0
  %v593 = vsel %vm55, %v577, 0
  %v596 = vsel %vm55, %v578, 0
  %v599 = vsel %vm55, %v579, 0
  %601 = vmatprep.subr.bf16.mxu0 %v587
  %602 = vmatpush1.bf16.msra.mxu0 %v584
  %603 = vmatprep.subr.bf16.mxu0 0
  %604 = vmatpush1.bf16.msra.mxu0 0
  %605 = vmatprep.subr.bf16.mxu0 0
  %606 = vmatpush1.bf16.msra.mxu0 0
  %607 = vmatprep.subr.bf16.mxu0 0
  %608 = vmatpush1.bf16.msra.mxu0 0
  %609 = vmatprep.subr.bf16.mxu0 0
  %610 = vmatpush1.bf16.msra.mxu0 0
  %611 = vmatprep.subr.bf16.mxu0 0
  %612 = vmatpush1.bf16.msra.mxu0 0
  %613 = vmatprep.subr.bf16.mxu0 0
  %614 = vmatpush1.bf16.msra.mxu0 0
  %615 = vmatprep.subr.bf16.mxu0 0
  %616 = vmatpush1.bf16.msra.mxu0 0
  %617 = vmatprep.subr.bf16.mxu0 0
  %618 = vmatpush1.bf16.msra.mxu0 0
  %619 = vmatprep.subr.bf16.mxu0 0
  %620 = vmatpush1.bf16.msra.mxu0 0
  %621 = vmatprep.subr.bf16.mxu0 0
  %622 = vmatpush1.bf16.msra.mxu0 0
  %623 = vmatprep.subr.bf16.mxu0 0
  %624 = vmatpush1.bf16.msra.mxu0 0
  %625 = vmatprep.subr.bf16.mxu0 0
  %626 = vmatpush1.bf16.msra.mxu0 0
  %627 = vmatprep.subr.bf16.mxu0 0
  %628 = vmatpush1.bf16.msra.mxu0 0
  %629 = vmatprep.subr.bf16.mxu0 0
  %630 = vmatpush1.bf16.msra.mxu0 0
  %631 = vmatprep.subr.bf16.mxu0 0
  %632 = vmatpush1.bf16.msra.mxu0 0
  %633 = vmatprep.mubr.bf16.mxu0 0
  %634 = vmatmul.mubr.bf16.gmra.mrb[0].mxu0 %v581
  %v635 = vpop.f32.mrb[0].mxu0
  %v636 = vadd.f32 0.0, %v635
  %v637 = vpop.f32.mrb[0].mxu0
  %v638 = vadd.f32 0.0, %v637
  %v639 = vpop.f32.mrb[0].mxu0
  %v640 = vpop.f32.mrb[0].mxu0
  %641 = vdwg.mxu0
  %642 = vmatprep.subr.bf16.mxu0 %v593
  %643 = vmatpush1.bf16.msra.mxu0 %v590
  %644 = vmatprep.subr.bf16.mxu0 0
  %645 = vmatpush1.bf16.msra.mxu0 0
  %646 = vmatprep.subr.bf16.mxu0 0
  %647 = vmatpush1.bf16.msra.mxu0 0
  %648 = vmatprep.subr.bf16.mxu0 0
  %649 = vmatpush1.bf16.msra.mxu0 0
  %650 = vmatprep.subr.bf16.mxu0 0
  %651 = vmatpush1.bf16.msra.mxu0 0
  %652 = vmatprep.subr.bf16.mxu0 0
  %653 = vmatpush1.bf16.msra.mxu0 0
  %654 = vmatprep.subr.bf16.mxu0 0
  %655 = vmatpush1.bf16.msra.mxu0 0
  %656 = vmatprep.subr.bf16.mxu0 0
  %657 = vmatpush1.bf16.msra.mxu0 0
  %658 = vmatprep.subr.bf16.mxu0 0
  %659 = vmatpush1.bf16.msra.mxu0 0
  %660 = vmatprep.subr.bf16.mxu0 0
  %661 = vmatpush1.bf16.msra.mxu0 0
  %662 = vmatprep.subr.bf16.mxu0 0
  %663 = vmatpush1.bf16.msra.mxu0 0
  %664 = vmatprep.subr.bf16.mxu0 0
  %665 = vmatpush1.bf16.msra.mxu0 0
  %666 = vmatprep.subr.bf16.mxu0 0
  %667 = vmatpush1.bf16.msra.mxu0 0
  %668 = vmatprep.subr.bf16.mxu0 0
  %669 = vmatpush1.bf16.msra.mxu0 0
  %670 = vmatprep.subr.bf16.mxu0 0
  %671 = vmatpush1.bf16.msra.mxu0 0
  %672 = vmatprep.subr.bf16.mxu0 0
  %673 = vmatpush1.bf16.msra.mxu0 0
  %674 = vmatprep.mubr.bf16.mxu0 0
  %675 = vmatmul.mubr.bf16.gmra.mrb[0].mxu0 %v581
  %v676 = vpop.f32.mrb[0].mxu0
  %v677 = vadd.f32 0.0, %v676
  %v678 = vpop.f32.mrb[0].mxu0
  %v679 = vadd.f32 0.0, %v678
  %v680 = vpop.f32.mrb[0].mxu0
  %v681 = vpop.f32.mrb[0].mxu0
  %682 = vdwg.mxu0
  %683 = vmatprep.subr.bf16.mxu0 %v599
  %684 = vmatpush1.bf16.msra.mxu0 %v596
  %685 = vmatprep.subr.bf16.mxu0 0
  %686 = vmatpush1.bf16.msra.mxu0 0
  %687 = vmatprep.subr.bf16.mxu0 0
  %688 = vmatpush1.bf16.msra.mxu0 0
  %689 = vmatprep.subr.bf16.mxu0 0
  %690 = vmatpush1.bf16.msra.mxu0 0
  %691 = vmatprep.subr.bf16.mxu0 0
  %692 = vmatpush1.bf16.msra.mxu0 0
  %693 = vmatprep.subr.bf16.mxu0 0
  %694 = vmatpush1.bf16.msra.mxu0 0
  %695 = vmatprep.subr.bf16.mxu0 0
  %696 = vmatpush1.bf16.msra.mxu0 0
  %697 = vmatprep.subr.bf16.mxu0 0
  %698 = vmatpush1.bf16.msra.mxu0 0
  %699 = vmatprep.subr.bf16.mxu0 0
  %700 = vmatpush1.bf16.msra.mxu0 0
  %701 = vmatprep.subr.bf16.mxu0 0
  %702 = vmatpush1.bf16.msra.mxu0 0
  %703 = vmatprep.subr.bf16.mxu0 0
  %704 = vmatpush1.bf16.msra.mxu0 0
  %705 = vmatprep.subr.bf16.mxu0 0
  %706 = vmatpush1.bf16.msra.mxu0 0
  %707 = vmatprep.subr.bf16.mxu0 0
  %708 = vmatpush1.bf16.msra.mxu0 0
  %709 = vmatprep.subr.bf16.mxu0 0
  %710 = vmatpush1.bf16.msra.mxu0 0
  %711 = vmatprep.subr.bf16.mxu0 0
  %712 = vmatpush1.bf16.msra.mxu0 0
  %713 = vmatprep.subr.bf16.mxu0 0
  %714 = vmatpush1.bf16.msra.mxu0 0
  %715 = vmatprep.mubr.bf16.mxu0 0
  %716 = vmatmul.mubr.bf16.gmra.mrb[0].mxu0 %v581
  %v717 = vpop.f32.mrb[0].mxu0
  %v718 = vadd.f32 0.0, %v717
  %v719 = vpop.f32.mrb[0].mxu0
  %v720 = vadd.f32 0.0, %v719
  %v721 = vpop.f32.mrb[0].mxu0
  %v722 = vpop.f32.mrb[0].mxu0
  %723 = vdwg.mxu0
  %v724 = vadd.f32 %v551, %v636
  %v725 = vadd.f32 %v552, %v638
  %v726 = vadd.f32 %v553, %v677
  %v727 = vadd.f32 %v554, %v679
  %v728 = vadd.f32 %v555, %v718
  %v729 = vadd.f32 %v556, %v720
  %s730 = scalar_lea.vmem %s0, 16
  %v731 = vld [vmem:[%s730] sm:$0xf]
  %732 = vrot.lane.b32.xlu0 %v33, 109
  %v733 = vpop.permute.xlu0 %732
  %734 = vrot.lane.b32.xlu0 %v41, 109
  %v735 = vpop.permute.xlu0 %734
  %736 = vrot.lane.b32.xlu0 %v40, 109
  %v737 = vpop.permute.xlu0 %736
  %738 = vrot.lane.b32.xlu0 %v42, 109
  %v739 = vpop.permute.xlu0 %738
  %740 = vrot.lane.b32.xlu0 %v49, 109
  %v741 = vpop.permute.xlu0 %740
  %742 = vrot.lane.b32.xlu0 %v50, 109
  %v743 = vpop.permute.xlu0 %742
  %744 = vrot.lane.b32.xlu0 %v212, 109
  %v745 = vpop.permute.xlu0 %744
  %vm746 = vcmask 891904
  %v747 = vsel %vm746, %v733, %v735
  %v748 = vsel %vm746, %v735, %v737
  %v749 = vsel %vm746, %v737, %v739
  %v750 = vsel %vm746, %v739, %v741
  %v751 = vsel %vm746, %v741, %v743
  %v752 = vsel %vm746, %v743, %v745
  %v754 = vsel %vm51, %v731, 0
  %v757 = vsel %vm55, %v747, 0
  %v760 = vsel %vm55, %v748, 0
  %v763 = vsel %vm55, %v749, 0
  %v766 = vsel %vm55, %v750, 0
  %v769 = vsel %vm55, %v751, 0
  %v772 = vsel %vm55, %v752, 0
  %774 = vmatprep.subr.bf16.mxu0 %v760
  %775 = vmatpush1.bf16.msra.mxu0 %v757
  %776 = vmatprep.subr.bf16.mxu0 0
  %777 = vmatpush1.bf16.msra.mxu0 0
  %778 = vmatprep.subr.bf16.mxu0 0
  %779 = vmatpush1.bf16.msra.mxu0 0
  %780 = vmatprep.subr.bf16.mxu0 0
  %781 = vmatpush1.bf16.msra.mxu0 0
  %782 = vmatprep.subr.bf16.mxu0 0
  %783 = vmatpush1.bf16.msra.mxu0 0
  %784 = vmatprep.subr.bf16.mxu0 0
  %785 = vmatpush1.bf16.msra.mxu0 0
  %786 = vmatprep.subr.bf16.mxu0 0
  %787 = vmatpush1.bf16.msra.mxu0 0
  %788 = vmatprep.subr.bf16.mxu0 0
  %789 = vmatpush1.bf16.msra.mxu0 0
  %790 = vmatprep.subr.bf16.mxu0 0
  %791 = vmatpush1.bf16.msra.mxu0 0
  %792 = vmatprep.subr.bf16.mxu0 0
  %793 = vmatpush1.bf16.msra.mxu0 0
  %794 = vmatprep.subr.bf16.mxu0 0
  %795 = vmatpush1.bf16.msra.mxu0 0
  %796 = vmatprep.subr.bf16.mxu0 0
  %797 = vmatpush1.bf16.msra.mxu0 0
  %798 = vmatprep.subr.bf16.mxu0 0
  %799 = vmatpush1.bf16.msra.mxu0 0
  %800 = vmatprep.subr.bf16.mxu0 0
  %801 = vmatpush1.bf16.msra.mxu0 0
  %802 = vmatprep.subr.bf16.mxu0 0
  %803 = vmatpush1.bf16.msra.mxu0 0
  %804 = vmatprep.subr.bf16.mxu0 0
  %805 = vmatpush1.bf16.msra.mxu0 0
  %806 = vmatprep.mubr.bf16.mxu0 0
  %807 = vmatmul.mubr.bf16.gmra.mrb[0].mxu0 %v754
  %v808 = vpop.f32.mrb[0].mxu0
  %v809 = vadd.f32 0.0, %v808
  %v810 = vpop.f32.mrb[0].mxu0
  %v811 = vadd.f32 0.0, %v810
  %v812 = vpop.f32.mrb[0].mxu0
  %v813 = vpop.f32.mrb[0].mxu0
  %814 = vdwg.mxu0
  %815 = vmatprep.subr.bf16.mxu0 %v766
  %816 = vmatpush1.bf16.msra.mxu0 %v763
  %817 = vmatprep.subr.bf16.mxu0 0
  %818 = vmatpush1.bf16.msra.mxu0 0
  %819 = vmatprep.subr.bf16.mxu0 0
  %820 = vmatpush1.bf16.msra.mxu0 0
  %821 = vmatprep.subr.bf16.mxu0 0
  %822 = vmatpush1.bf16.msra.mxu0 0
  %823 = vmatprep.subr.bf16.mxu0 0
  %824 = vmatpush1.bf16.msra.mxu0 0
  %825 = vmatprep.subr.bf16.mxu0 0
  %826 = vmatpush1.bf16.msra.mxu0 0
  %827 = vmatprep.subr.bf16.mxu0 0
  %828 = vmatpush1.bf16.msra.mxu0 0
  %829 = vmatprep.subr.bf16.mxu0 0
  %830 = vmatpush1.bf16.msra.mxu0 0
  %831 = vmatprep.subr.bf16.mxu0 0
  %832 = vmatpush1.bf16.msra.mxu0 0
  %833 = vmatprep.subr.bf16.mxu0 0
  %834 = vmatpush1.bf16.msra.mxu0 0
  %835 = vmatprep.subr.bf16.mxu0 0
  %836 = vmatpush1.bf16.msra.mxu0 0
  %837 = vmatprep.subr.bf16.mxu0 0
  %838 = vmatpush1.bf16.msra.mxu0 0
  %839 = vmatprep.subr.bf16.mxu0 0
  %840 = vmatpush1.bf16.msra.mxu0 0
  %841 = vmatprep.subr.bf16.mxu0 0
  %842 = vmatpush1.bf16.msra.mxu0 0
  %843 = vmatprep.subr.bf16.mxu0 0
  %844 = vmatpush1.bf16.msra.mxu0 0
  %845 = vmatprep.subr.bf16.mxu0 0
  %846 = vmatpush1.bf16.msra.mxu0 0
  %847 = vmatprep.mubr.bf16.mxu0 0
  %848 = vmatmul.mubr.bf16.gmra.mrb[0].mxu0 %v754
  %v849 = vpop.f32.mrb[0].mxu0
  %v850 = vadd.f32 0.0, %v849
  %v851 = vpop.f32.mrb[0].mxu0
  %v852 = vadd.f32 0.0, %v851
  %v853 = vpop.f32.mrb[0].mxu0
  %v854 = vpop.f32.mrb[0].mxu0
  %855 = vdwg.mxu0
  %856 = vmatprep.subr.bf16.mxu0 %v772
  %857 = vmatpush1.bf16.msra.mxu0 %v769
  %858 = vmatprep.subr.bf16.mxu0 0
  %859 = vmatpush1.bf16.msra.mxu0 0
  %860 = vmatprep.subr.bf16.mxu0 0
  %861 = vmatpush1.bf16.msra.mxu0 0
  %862 = vmatprep.subr.bf16.mxu0 0
  %863 = vmatpush1.bf16.msra.mxu0 0
  %864 = vmatprep.subr.bf16.mxu0 0
  %865 = vmatpush1.bf16.msra.mxu0 0
  %866 = vmatprep.subr.bf16.mxu0 0
  %867 = vmatpush1.bf16.msra.mxu0 0
  %868 = vmatprep.subr.bf16.mxu0 0
  %869 = vmatpush1.bf16.msra.mxu0 0
  %870 = vmatprep.subr.bf16.mxu0 0
  %871 = vmatpush1.bf16.msra.mxu0 0
  %872 = vmatprep.subr.bf16.mxu0 0
  %873 = vmatpush1.bf16.msra.mxu0 0
  %874 = vmatprep.subr.bf16.mxu0 0
  %875 = vmatpush1.bf16.msra.mxu0 0
  %876 = vmatprep.subr.bf16.mxu0 0
  %877 = vmatpush1.bf16.msra.mxu0 0
  %878 = vmatprep.subr.bf16.mxu0 0
  %879 = vmatpush1.bf16.msra.mxu0 0
  %880 = vmatprep.subr.bf16.mxu0 0
  %881 = vmatpush1.bf16.msra.mxu0 0
  %882 = vmatprep.subr.bf16.mxu0 0
  %883 = vmatpush1.bf16.msra.mxu0 0
  %884 = vmatprep.subr.bf16.mxu0 0
  %885 = vmatpush1.bf16.msra.mxu0 0
  %886 = vmatprep.subr.bf16.mxu0 0
  %887 = vmatpush1.bf16.msra.mxu0 0
  %888 = vmatprep.mubr.bf16.mxu0 0
  %889 = vmatmul.mubr.bf16.gmra.mrb[0].mxu0 %v754
  %v890 = vpop.f32.mrb[0].mxu0
  %v891 = vadd.f32 0.0, %v890
  %v892 = vpop.f32.mrb[0].mxu0
  %v893 = vadd.f32 0.0, %v892
  %v894 = vpop.f32.mrb[0].mxu0
  %v895 = vpop.f32.mrb[0].mxu0
  %896 = vdwg.mxu0
  %v897 = vadd.f32 %v724, %v809
  %v898 = vadd.f32 %v725, %v811
  %v899 = vadd.f32 %v726, %v850
  %v900 = vadd.f32 %v727, %v852
  %v901 = vadd.f32 %v728, %v891
  %v902 = vadd.f32 %v729, %v893
  %s903 = scalar_lea.vmem %s0, 20
  %v904 = vld [vmem:[%s903] sm:$0xf]
  %905 = vrot.lane.b32.xlu0 %v33, 108
  %v906 = vpop.permute.xlu0 %905
  %907 = vrot.lane.b32.xlu0 %v41, 108
  %v908 = vpop.permute.xlu0 %907
  %909 = vrot.lane.b32.xlu0 %v40, 108
  %v910 = vpop.permute.xlu0 %909
  %911 = vrot.lane.b32.xlu0 %v42, 108
  %v912 = vpop.permute.xlu0 %911
  %913 = vrot.lane.b32.xlu0 %v49, 108
  %v914 = vpop.permute.xlu0 %913
  %915 = vrot.lane.b32.xlu0 %v50, 108
  %v916 = vpop.permute.xlu0 %915
  %917 = vrot.lane.b32.xlu0 %v212, 108
  %v918 = vpop.permute.xlu0 %917
  %vm919 = vcmask 883712
  %v920 = vsel %vm919, %v906, %v908
  %v921 = vsel %vm919, %v908, %v910
  %v922 = vsel %vm919, %v910, %v912
  %v923 = vsel %vm919, %v912, %v914
  %v924 = vsel %vm919, %v914, %v916
  %v925 = vsel %vm919, %v916, %v918
  %v927 = vsel %vm51, %v904, 0
  %v930 = vsel %vm55, %v920, 0
  %v933 = vsel %vm55, %v921, 0
  %v936 = vsel %vm55, %v922, 0
  %v939 = vsel %vm55, %v923, 0
  %v942 = vsel %vm55, %v924, 0
  %v945 = vsel %vm55, %v925, 0
  %947 = vmatprep.subr.bf16.mxu0 %v933
  %948 = vmatpush1.bf16.msra.mxu0 %v930
  %949 = vmatprep.subr.bf16.mxu0 0
  %950 = vmatpush1.bf16.msra.mxu0 0
  %951 = vmatprep.subr.bf16.mxu0 0
  %952 = vmatpush1.bf16.msra.mxu0 0
  %953 = vmatprep.subr.bf16.mxu0 0
  %954 = vmatpush1.bf16.msra.mxu0 0
  %955 = vmatprep.subr.bf16.mxu0 0
  %956 = vmatpush1.bf16.msra.mxu0 0
  %957 = vmatprep.subr.bf16.mxu0 0
  %958 = vmatpush1.bf16.msra.mxu0 0
  %959 = vmatprep.subr.bf16.mxu0 0
  %960 = vmatpush1.bf16.msra.mxu0 0
  %961 = vmatprep.subr.bf16.mxu0 0
  %962 = vmatpush1.bf16.msra.mxu0 0
  %963 = vmatprep.subr.bf16.mxu0 0
  %964 = vmatpush1.bf16.msra.mxu0 0
  %965 = vmatprep.subr.bf16.mxu0 0
  %966 = vmatpush1.bf16.msra.mxu0 0
  %967 = vmatprep.subr.bf16.mxu0 0
  %968 = vmatpush1.bf16.msra.mxu0 0
  %969 = vmatprep.subr.bf16.mxu0 0
  %970 = vmatpush1.bf16.msra.mxu0 0
  %971 = vmatprep.subr.bf16.mxu0 0
  %972 = vmatpush1.bf16.msra.mxu0 0
  %973 = vmatprep.subr.bf16.mxu0 0
  %974 = vmatpush1.bf16.msra.mxu0 0
  %975 = vmatprep.subr.bf16.mxu0 0
  %976 = vmatpush1.bf16.msra.mxu0 0
  %977 = vmatprep.subr.bf16.mxu0 0
  %978 = vmatpush1.bf16.msra.mxu0 0
  %979 = vmatprep.mubr.bf16.mxu0 0
  %980 = vmatmul.mubr.bf16.gmra.mrb[0].mxu0 %v927
  %v981 = vpop.f32.mrb[0].mxu0
  %v982 = vadd.f32 0.0, %v981
  %v983 = vpop.f32.mrb[0].mxu0
  %v984 = vadd.f32 0.0, %v983
  %v985 = vpop.f32.mrb[0].mxu0
  %v986 = vpop.f32.mrb[0].mxu0
  %987 = vdwg.mxu0
  %988 = vmatprep.subr.bf16.mxu0 %v939
  %989 = vmatpush1.bf16.msra.mxu0 %v936
  %990 = vmatprep.subr.bf16.mxu0 0
  %991 = vmatpush1.bf16.msra.mxu0 0
  %992 = vmatprep.subr.bf16.mxu0 0
  %993 = vmatpush1.bf16.msra.mxu0 0
  %994 = vmatprep.subr.bf16.mxu0 0
  %995 = vmatpush1.bf16.msra.mxu0 0
  %996 = vmatprep.subr.bf16.mxu0 0
  %997 = vmatpush1.bf16.msra.mxu0 0
  %998 = vmatprep.subr.bf16.mxu0 0
  %999 = vmatpush1.bf16.msra.mxu0 0
  %1000 = vmatprep.subr.bf16.mxu0 0
  %1001 = vmatpush1.bf16.msra.mxu0 0
  %1002 = vmatprep.subr.bf16.mxu0 0
  %1003 = vmatpush1.bf16.msra.mxu0 0
  %1004 = vmatprep.subr.bf16.mxu0 0
  %1005 = vmatpush1.bf16.msra.mxu0 0
  %1006 = vmatprep.subr.bf16.mxu0 0
  %1007 = vmatpush1.bf16.msra.mxu0 0
  %1008 = vmatprep.subr.bf16.mxu0 0
  %1009 = vmatpush1.bf16.msra.mxu0 0
  %1010 = vmatprep.subr.bf16.mxu0 0
  %1011 = vmatpush1.bf16.msra.mxu0 0
  %1012 = vmatprep.subr.bf16.mxu0 0
  %1013 = vmatpush1.bf16.msra.mxu0 0
  %1014 = vmatprep.subr.bf16.mxu0 0
  %1015 = vmatpush1.bf16.msra.mxu0 0
  %1016 = vmatprep.subr.bf16.mxu0 0
  %1017 = vmatpush1.bf16.msra.mxu0 0
  %1018 = vmatprep.subr.bf16.mxu0 0
  %1019 = vmatpush1.bf16.msra.mxu0 0
  %1020 = vmatprep.mubr.bf16.mxu0 0
  %1021 = vmatmul.mubr.bf16.gmra.mrb[0].mxu0 %v927
  %v1022 = vpop.f32.mrb[0].mxu0
  %v1023 = vadd.f32 0.0, %v1022
  %v1024 = vpop.f32.mrb[0].mxu0
  %v1025 = vadd.f32 0.0, %v1024
  %v1026 = vpop.f32.mrb[0].mxu0
  %v1027 = vpop.f32.mrb[0].mxu0
  %1028 = vdwg.mxu0
  %1029 = vmatprep.subr.bf16.mxu0 %v945
  %1030 = vmatpush1.bf16.msra.mxu0 %v942
  %1031 = vmatprep.subr.bf16.mxu0 0
  %1032 = vmatpush1.bf16.msra.mxu0 0
  %1033 = vmatprep.subr.bf16.mxu0 0
  %1034 = vmatpush1.bf16.msra.mxu0 0
  %1035 = vmatprep.subr.bf16.mxu0 0
  %1036 = vmatpush1.bf16.msra.mxu0 0
  %1037 = vmatprep.subr.bf16.mxu0 0
  %1038 = vmatpush1.bf16.msra.mxu0 0
  %1039 = vmatprep.subr.bf16.mxu0 0
  %1040 = vmatpush1.bf16.msra.mxu0 0
  %1041 = vmatprep.subr.bf16.mxu0 0
  %1042 = vmatpush1.bf16.msra.mxu0 0
  %1043 = vmatprep.subr.bf16.mxu0 0
  %1044 = vmatpush1.bf16.msra.mxu0 0
  %1045 = vmatprep.subr.bf16.mxu0 0
  %1046 = vmatpush1.bf16.msra.mxu0 0
  %1047 = vmatprep.subr.bf16.mxu0 0
  %1048 = vmatpush1.bf16.msra.mxu0 0
  %1049 = vmatprep.subr.bf16.mxu0 0
  %1050 = vmatpush1.bf16.msra.mxu0 0
  %1051 = vmatprep.subr.bf16.mxu0 0
  %1052 = vmatpush1.bf16.msra.mxu0 0
  %1053 = vmatprep.subr.bf16.mxu0 0
  %1054 = vmatpush1.bf16.msra.mxu0 0
  %1055 = vmatprep.subr.bf16.mxu0 0
  %1056 = vmatpush1.bf16.msra.mxu0 0
  %1057 = vmatprep.subr.bf16.mxu0 0
  %1058 = vmatpush1.bf16.msra.mxu0 0
  %1059 = vmatprep.subr.bf16.mxu0 0
  %1060 = vmatpush1.bf16.msra.mxu0 0
  %1061 = vmatprep.mubr.bf16.mxu0 0
  %1062 = vmatmul.mubr.bf16.gmra.mrb[0].mxu0 %v927
  %v1063 = vpop.f32.mrb[0].mxu0
  %v1064 = vadd.f32 0.0, %v1063
  %v1065 = vpop.f32.mrb[0].mxu0
  %v1066 = vadd.f32 0.0, %v1065
  %v1067 = vpop.f32.mrb[0].mxu0
  %v1068 = vpop.f32.mrb[0].mxu0
  %1069 = vdwg.mxu0
  %v1070 = vadd.f32 %v897, %v982
  %v1071 = vadd.f32 %v898, %v984
  %v1072 = vadd.f32 %v899, %v1023
  %v1073 = vadd.f32 %v900, %v1025
  %v1074 = vadd.f32 %v901, %v1064
  %v1075 = vadd.f32 %v902, %v1066
  %s1076 = scalar_lea.vmem %s0, 24
  %v1077 = vld [vmem:[%s1076] sm:$0xf]
  %1078 = vrot.lane.b32.xlu0 %v33, 92
  %v1079 = vpop.permute.xlu0 %1078
  %1080 = vrot.lane.b32.xlu0 %v41, 92
  %v1081 = vpop.permute.xlu0 %1080
  %1082 = vrot.lane.b32.xlu0 %v40, 92
  %v1083 = vpop.permute.xlu0 %1082
  %1084 = vrot.lane.b32.xlu0 %v42, 92
  %v1085 = vpop.permute.xlu0 %1084
  %1086 = vrot.lane.b32.xlu0 %v49, 92
  %v1087 = vpop.permute.xlu0 %1086
  %1088 = vrot.lane.b32.xlu0 %v50, 92
  %v1089 = vpop.permute.xlu0 %1088
  %1090 = vrot.lane.b32.xlu0 %v212, 92
  %v1091 = vpop.permute.xlu0 %1090
  %vm1092 = vcmask 752640
  %v1093 = vsel %vm1092, %v1079, %v1081
  %v1094 = vsel %vm1092, %v1081, %v1083
  %v1095 = vsel %vm1092, %v1083, %v1085
  %v1096 = vsel %vm1092, %v1085, %v1087
  %v1097 = vsel %vm1092, %v1087, %v1089
  %v1098 = vsel %vm1092, %v1089, %v1091
  %v1100 = vsel %vm51, %v1077, 0
  %v1103 = vsel %vm55, %v1093, 0
  %v1106 = vsel %vm55, %v1094, 0
  %v1109 = vsel %vm55, %v1095, 0
  %v1112 = vsel %vm55, %v1096, 0
  %v1115 = vsel %vm55, %v1097, 0
  %v1118 = vsel %vm55, %v1098, 0
  %1120 = vmatprep.subr.bf16.mxu0 %v1106
  %1121 = vmatpush1.bf16.msra.mxu0 %v1103
  %1122 = vmatprep.subr.bf16.mxu0 0
  %1123 = vmatpush1.bf16.msra.mxu0 0
  %1124 = vmatprep.subr.bf16.mxu0 0
  %1125 = vmatpush1.bf16.msra.mxu0 0
  %1126 = vmatprep.subr.bf16.mxu0 0
  %1127 = vmatpush1.bf16.msra.mxu0 0
  %1128 = vmatprep.subr.bf16.mxu0 0
  %1129 = vmatpush1.bf16.msra.mxu0 0
  %1130 = vmatprep.subr.bf16.mxu0 0
  %1131 = vmatpush1.bf16.msra.mxu0 0
  %1132 = vmatprep.subr.bf16.mxu0 0
  %1133 = vmatpush1.bf16.msra.mxu0 0
  %1134 = vmatprep.subr.bf16.mxu0 0
  %1135 = vmatpush1.bf16.msra.mxu0 0
  %1136 = vmatprep.subr.bf16.mxu0 0
  %1137 = vmatpush1.bf16.msra.mxu0 0
  %1138 = vmatprep.subr.bf16.mxu0 0
  %1139 = vmatpush1.bf16.msra.mxu0 0
  %1140 = vmatprep.subr.bf16.mxu0 0
  %1141 = vmatpush1.bf16.msra.mxu0 0
  %1142 = vmatprep.subr.bf16.mxu0 0
  %1143 = vmatpush1.bf16.msra.mxu0 0
  %1144 = vmatprep.subr.bf16.mxu0 0
  %1145 = vmatpush1.bf16.msra.mxu0 0
  %1146 = vmatprep.subr.bf16.mxu0 0
  %1147 = vmatpush1.bf16.msra.mxu0 0
  %1148 = vmatprep.subr.bf16.mxu0 0
  %1149 = vmatpush1.bf16.msra.mxu0 0
  %1150 = vmatprep.subr.bf16.mxu0 0
  %1151 = vmatpush1.bf16.msra.mxu0 0
  %1152 = vmatprep.mubr.bf16.mxu0 0
  %1153 = vmatmul.mubr.bf16.gmra.mrb[0].mxu0 %v1100
  %v1154 = vpop.f32.mrb[0].mxu0
  %v1155 = vadd.f32 0.0, %v1154
  %v1156 = vpop.f32.mrb[0].mxu0
  %v1157 = vadd.f32 0.0, %v1156
  %v1158 = vpop.f32.mrb[0].mxu0
  %v1159 = vpop.f32.mrb[0].mxu0
  %1160 = vdwg.mxu0
  %1161 = vmatprep.subr.bf16.mxu0 %v1112
  %1162 = vmatpush1.bf16.msra.mxu0 %v1109
  %1163 = vmatprep.subr.bf16.mxu0 0
  %1164 = vmatpush1.bf16.msra.mxu0 0
  %1165 = vmatprep.subr.bf16.mxu0 0
  %1166 = vmatpush1.bf16.msra.mxu0 0
  %1167 = vmatprep.subr.bf16.mxu0 0
  %1168 = vmatpush1.bf16.msra.mxu0 0
  %1169 = vmatprep.subr.bf16.mxu0 0
  %1170 = vmatpush1.bf16.msra.mxu0 0
  %1171 = vmatprep.subr.bf16.mxu0 0
  %1172 = vmatpush1.bf16.msra.mxu0 0
  %1173 = vmatprep.subr.bf16.mxu0 0
  %1174 = vmatpush1.bf16.msra.mxu0 0
  %1175 = vmatprep.subr.bf16.mxu0 0
  %1176 = vmatpush1.bf16.msra.mxu0 0
  %1177 = vmatprep.subr.bf16.mxu0 0
  %1178 = vmatpush1.bf16.msra.mxu0 0
  %1179 = vmatprep.subr.bf16.mxu0 0
  %1180 = vmatpush1.bf16.msra.mxu0 0
  %1181 = vmatprep.subr.bf16.mxu0 0
  %1182 = vmatpush1.bf16.msra.mxu0 0
  %1183 = vmatprep.subr.bf16.mxu0 0
  %1184 = vmatpush1.bf16.msra.mxu0 0
  %1185 = vmatprep.subr.bf16.mxu0 0
  %1186 = vmatpush1.bf16.msra.mxu0 0
  %1187 = vmatprep.subr.bf16.mxu0 0
  %1188 = vmatpush1.bf16.msra.mxu0 0
  %1189 = vmatprep.subr.bf16.mxu0 0
  %1190 = vmatpush1.bf16.msra.mxu0 0
  %1191 = vmatprep.subr.bf16.mxu0 0
  %1192 = vmatpush1.bf16.msra.mxu0 0
  %1193 = vmatprep.mubr.bf16.mxu0 0
  %1194 = vmatmul.mubr.bf16.gmra.mrb[0].mxu0 %v1100
  %v1195 = vpop.f32.mrb[0].mxu0
  %v1196 = vadd.f32 0.0, %v1195
  %v1197 = vpop.f32.mrb[0].mxu0
  %v1198 = vadd.f32 0.0, %v1197
  %v1199 = vpop.f32.mrb[0].mxu0
  %v1200 = vpop.f32.mrb[0].mxu0
  %1201 = vdwg.mxu0
  %1202 = vmatprep.subr.bf16.mxu0 %v1118
  %1203 = vmatpush1.bf16.msra.mxu0 %v1115
  %1204 = vmatprep.subr.bf16.mxu0 0
  %1205 = vmatpush1.bf16.msra.mxu0 0
  %1206 = vmatprep.subr.bf16.mxu0 0
  %1207 = vmatpush1.bf16.msra.mxu0 0
  %1208 = vmatprep.subr.bf16.mxu0 0
  %1209 = vmatpush1.bf16.msra.mxu0 0
  %1210 = vmatprep.subr.bf16.mxu0 0
  %1211 = vmatpush1.bf16.msra.mxu0 0
  %1212 = vmatprep.subr.bf16.mxu0 0
  %1213 = vmatpush1.bf16.msra.mxu0 0
  %1214 = vmatprep.subr.bf16.mxu0 0
  %1215 = vmatpush1.bf16.msra.mxu0 0
  %1216 = vmatprep.subr.bf16.mxu0 0
  %1217 = vmatpush1.bf16.msra.mxu0 0
  %1218 = vmatprep.subr.bf16.mxu0 0
  %1219 = vmatpush1.bf16.msra.mxu0 0
  %1220 = vmatprep.subr.bf16.mxu0 0
  %1221 = vmatpush1.bf16.msra.mxu0 0
  %1222 = vmatprep.subr.bf16.mxu0 0
  %1223 = vmatpush1.bf16.msra.mxu0 0
  %1224 = vmatprep.subr.bf16.mxu0 0
  %1225 = vmatpush1.bf16.msra.mxu0 0
  %1226 = vmatprep.subr.bf16.mxu0 0
  %1227 = vmatpush1.bf16.msra.mxu0 0
  %1228 = vmatprep.subr.bf16.mxu0 0
  %1229 = vmatpush1.bf16.msra.mxu0 0
  %1230 = vmatprep.subr.bf16.mxu0 0
  %1231 = vmatpush1.bf16.msra.mxu0 0
  %1232 = vmatprep.subr.bf16.mxu0 0
  %1233 = vmatpush1.bf16.msra.mxu0 0
  %1234 = vmatprep.mubr.bf16.mxu0 0
  %1235 = vmatmul.mubr.bf16.gmra.mrb[0].mxu0 %v1100
  %v1236 = vpop.f32.mrb[0].mxu0
  %v1237 = vadd.f32 0.0, %v1236
  %v1238 = vpop.f32.mrb[0].mxu0
  %v1239 = vadd.f32 0.0, %v1238
  %v1240 = vpop.f32.mrb[0].mxu0
  %v1241 = vpop.f32.mrb[0].mxu0
  %1242 = vdwg.mxu0
  %v1243 = vadd.f32 %v1070, %v1155
  %v1244 = vadd.f32 %v1071, %v1157
  %v1245 = vadd.f32 %v1072, %v1196
  %v1246 = vadd.f32 %v1073, %v1198
  %v1247 = vadd.f32 %v1074, %v1237
  %v1248 = vadd.f32 %v1075, %v1239
  %s1249 = scalar_lea.vmem %s0, 28
  %v1250 = vld [vmem:[%s1249] sm:$0xf]
  %1251 = vrot.lane.b32.xlu0 %v33, 91
  %v1252 = vpop.permute.xlu0 %1251
  %1253 = vrot.lane.b32.xlu0 %v41, 91
  %v1254 = vpop.permute.xlu0 %1253
  %1255 = vrot.lane.b32.xlu0 %v40, 91
  %v1256 = vpop.permute.xlu0 %1255
  %1257 = vrot.lane.b32.xlu0 %v42, 91
  %v1258 = vpop.permute.xlu0 %1257
  %1259 = vrot.lane.b32.xlu0 %v49, 91
  %v1260 = vpop.permute.xlu0 %1259
  %1261 = vrot.lane.b32.xlu0 %v50, 91
  %v1262 = vpop.permute.xlu0 %1261
  %1263 = vrot.lane.b32.xlu0 %v212, 91
  %v1264 = vpop.permute.xlu0 %1263
  %vm1265 = vcmask 744448
  %v1266 = vsel %vm1265, %v1252, %v1254
  %v1267 = vsel %vm1265, %v1254, %v1256
  %v1268 = vsel %vm1265, %v1256, %v1258
  %v1269 = vsel %vm1265, %v1258, %v1260
  %v1270 = vsel %vm1265, %v1260, %v1262
  %v1271 = vsel %vm1265, %v1262, %v1264
  %v1273 = vsel %vm51, %v1250, 0
  %v1276 = vsel %vm55, %v1266, 0
  %v1279 = vsel %vm55, %v1267, 0
  %v1282 = vsel %vm55, %v1268, 0
  %v1285 = vsel %vm55, %v1269, 0
  %v1288 = vsel %vm55, %v1270, 0
  %v1291 = vsel %vm55, %v1271, 0
  %1293 = vmatprep.subr.bf16.mxu0 %v1279
  %1294 = vmatpush1.bf16.msra.mxu0 %v1276
  %1295 = vmatprep.subr.bf16.mxu0 0
  %1296 = vmatpush1.bf16.msra.mxu0 0
  %1297 = vmatprep.subr.bf16.mxu0 0
  %1298 = vmatpush1.bf16.msra.mxu0 0
  %1299 = vmatprep.subr.bf16.mxu0 0
  %1300 = vmatpush1.bf16.msra.mxu0 0
  %1301 = vmatprep.subr.bf16.mxu0 0
  %1302 = vmatpush1.bf16.msra.mxu0 0
  %1303 = vmatprep.subr.bf16.mxu0 0
  %1304 = vmatpush1.bf16.msra.mxu0 0
  %1305 = vmatprep.subr.bf16.mxu0 0
  %1306 = vmatpush1.bf16.msra.mxu0 0
  %1307 = vmatprep.subr.bf16.mxu0 0
  %1308 = vmatpush1.bf16.msra.mxu0 0
  %1309 = vmatprep.subr.bf16.mxu0 0
  %1310 = vmatpush1.bf16.msra.mxu0 0
  %1311 = vmatprep.subr.bf16.mxu0 0
  %1312 = vmatpush1.bf16.msra.mxu0 0
  %1313 = vmatprep.subr.bf16.mxu0 0
  %1314 = vmatpush1.bf16.msra.mxu0 0
  %1315 = vmatprep.subr.bf16.mxu0 0
  %1316 = vmatpush1.bf16.msra.mxu0 0
  %1317 = vmatprep.subr.bf16.mxu0 0
  %1318 = vmatpush1.bf16.msra.mxu0 0
  %1319 = vmatprep.subr.bf16.mxu0 0
  %1320 = vmatpush1.bf16.msra.mxu0 0
  %1321 = vmatprep.subr.bf16.mxu0 0
  %1322 = vmatpush1.bf16.msra.mxu0 0
  %1323 = vmatprep.subr.bf16.mxu0 0
  %1324 = vmatpush1.bf16.msra.mxu0 0
  %1325 = vmatprep.mubr.bf16.mxu0 0
  %1326 = vmatmul.mubr.bf16.gmra.mrb[0].mxu0 %v1273
  %v1327 = vpop.f32.mrb[0].mxu0
  %v1328 = vadd.f32 0.0, %v1327
  %v1329 = vpop.f32.mrb[0].mxu0
  %v1330 = vadd.f32 0.0, %v1329
  %v1331 = vpop.f32.mrb[0].mxu0
  %v1332 = vpop.f32.mrb[0].mxu0
  %1333 = vdwg.mxu0
  %1334 = vmatprep.subr.bf16.mxu0 %v1285
  %1335 = vmatpush1.bf16.msra.mxu0 %v1282
  %1336 = vmatprep.subr.bf16.mxu0 0
  %1337 = vmatpush1.bf16.msra.mxu0 0
  %1338 = vmatprep.subr.bf16.mxu0 0
  %1339 = vmatpush1.bf16.msra.mxu0 0
  %1340 = vmatprep.subr.bf16.mxu0 0
  %1341 = vmatpush1.bf16.msra.mxu0 0
  %1342 = vmatprep.subr.bf16.mxu0 0
  %1343 = vmatpush1.bf16.msra.mxu0 0
  %1344 = vmatprep.subr.bf16.mxu0 0
  %1345 = vmatpush1.bf16.msra.mxu0 0
  %1346 = vmatprep.subr.bf16.mxu0 0
  %1347 = vmatpush1.bf16.msra.mxu0 0
  %1348 = vmatprep.subr.bf16.mxu0 0
  %1349 = vmatpush1.bf16.msra.mxu0 0
  %1350 = vmatprep.subr.bf16.mxu0 0
  %1351 = vmatpush1.bf16.msra.mxu0 0
  %1352 = vmatprep.subr.bf16.mxu0 0
  %1353 = vmatpush1.bf16.msra.mxu0 0
  %1354 = vmatprep.subr.bf16.mxu0 0
  %1355 = vmatpush1.bf16.msra.mxu0 0
  %1356 = vmatprep.subr.bf16.mxu0 0
  %1357 = vmatpush1.bf16.msra.mxu0 0
  %1358 = vmatprep.subr.bf16.mxu0 0
  %1359 = vmatpush1.bf16.msra.mxu0 0
  %1360 = vmatprep.subr.bf16.mxu0 0
  %1361 = vmatpush1.bf16.msra.mxu0 0
  %1362 = vmatprep.subr.bf16.mxu0 0
  %1363 = vmatpush1.bf16.msra.mxu0 0
  %1364 = vmatprep.subr.bf16.mxu0 0
  %1365 = vmatpush1.bf16.msra.mxu0 0
  %1366 = vmatprep.mubr.bf16.mxu0 0
  %1367 = vmatmul.mubr.bf16.gmra.mrb[0].mxu0 %v1273
  %v1368 = vpop.f32.mrb[0].mxu0
  %v1369 = vadd.f32 0.0, %v1368
  %v1370 = vpop.f32.mrb[0].mxu0
  %v1371 = vadd.f32 0.0, %v1370
  %v1372 = vpop.f32.mrb[0].mxu0
  %v1373 = vpop.f32.mrb[0].mxu0
  %1374 = vdwg.mxu0
  %1375 = vmatprep.subr.bf16.mxu0 %v1291
  %1376 = vmatpush1.bf16.msra.mxu0 %v1288
  %1377 = vmatprep.subr.bf16.mxu0 0
  %1378 = vmatpush1.bf16.msra.mxu0 0
  %1379 = vmatprep.subr.bf16.mxu0 0
  %1380 = vmatpush1.bf16.msra.mxu0 0
  %1381 = vmatprep.subr.bf16.mxu0 0
  %1382 = vmatpush1.bf16.msra.mxu0 0
  %1383 = vmatprep.subr.bf16.mxu0 0
  %1384 = vmatpush1.bf16.msra.mxu0 0
  %1385 = vmatprep.subr.bf16.mxu0 0
  %1386 = vmatpush1.bf16.msra.mxu0 0
  %1387 = vmatprep.subr.bf16.mxu0 0
  %1388 = vmatpush1.bf16.msra.mxu0 0
  %1389 = vmatprep.subr.bf16.mxu0 0
  %1390 = vmatpush1.bf16.msra.mxu0 0
  %1391 = vmatprep.subr.bf16.mxu0 0
  %1392 = vmatpush1.bf16.msra.mxu0 0
  %1393 = vmatprep.subr.bf16.mxu0 0
  %1394 = vmatpush1.bf16.msra.mxu0 0
  %1395 = vmatprep.subr.bf16.mxu0 0
  %1396 = vmatpush1.bf16.msra.mxu0 0
  %1397 = vmatprep.subr.bf16.mxu0 0
  %1398 = vmatpush1.bf16.msra.mxu0 0
  %1399 = vmatprep.subr.bf16.mxu0 0
  %1400 = vmatpush1.bf16.msra.mxu0 0
  %1401 = vmatprep.subr.bf16.mxu0 0
  %1402 = vmatpush1.bf16.msra.mxu0 0
  %1403 = vmatprep.subr.bf16.mxu0 0
  %1404 = vmatpush1.bf16.msra.mxu0 0
  %1405 = vmatprep.subr.bf16.mxu0 0
  %1406 = vmatpush1.bf16.msra.mxu0 0
  %1407 = vmatprep.mubr.bf16.mxu0 0
  %1408 = vmatmul.mubr.bf16.gmra.mrb[0].mxu0 %v1273
  %v1409 = vpop.f32.mrb[0].mxu0
  %v1410 = vadd.f32 0.0, %v1409
  %v1411 = vpop.f32.mrb[0].mxu0
  %v1412 = vadd.f32 0.0, %v1411
  %v1413 = vpop.f32.mrb[0].mxu0
  %v1414 = vpop.f32.mrb[0].mxu0
  %1415 = vdwg.mxu0
  %v1416 = vadd.f32 %v1243, %v1328
  %v1417 = vadd.f32 %v1244, %v1330
  %v1418 = vadd.f32 %v1245, %v1369
  %v1419 = vadd.f32 %v1246, %v1371
  %v1420 = vadd.f32 %v1247, %v1410
  %v1421 = vadd.f32 %v1248, %v1412
  %s1422 = scalar_lea.vmem %s0, 32
  %v1423 = vld [vmem:[%s1422] sm:$0xf]
  %1424 = vrot.lane.b32.xlu0 %v33, 90
  %v1425 = vpop.permute.xlu0 %1424
  %1426 = vrot.lane.b32.xlu0 %v41, 90
  %v1427 = vpop.permute.xlu0 %1426
  %1428 = vrot.lane.b32.xlu0 %v40, 90
  %v1429 = vpop.permute.xlu0 %1428
  %1430 = vrot.lane.b32.xlu0 %v42, 90
  %v1431 = vpop.permute.xlu0 %1430
  %1432 = vrot.lane.b32.xlu0 %v49, 90
  %v1433 = vpop.permute.xlu0 %1432
  %1434 = vrot.lane.b32.xlu0 %v50, 90
  %v1435 = vpop.permute.xlu0 %1434
  %1436 = vrot.lane.b32.xlu0 %v212, 90
  %v1437 = vpop.permute.xlu0 %1436
  %vm1438 = vcmask 736256
  %v1439 = vsel %vm1438, %v1425, %v1427
  %v1440 = vsel %vm1438, %v1427, %v1429
  %v1441 = vsel %vm1438, %v1429, %v1431
  %v1442 = vsel %vm1438, %v1431, %v1433
  %v1443 = vsel %vm1438, %v1433, %v1435
  %v1444 = vsel %vm1438, %v1435, %v1437
  %v1446 = vsel %vm51, %v1423, 0
  %v1449 = vsel %vm55, %v1439, 0
  %v1452 = vsel %vm55, %v1440, 0
  %v1455 = vsel %vm55, %v1441, 0
  %v1458 = vsel %vm55, %v1442, 0
  %v1461 = vsel %vm55, %v1443, 0
  %v1464 = vsel %vm55, %v1444, 0
  %1466 = vmatprep.subr.bf16.mxu0 %v1452
  %1467 = vmatpush1.bf16.msra.mxu0 %v1449
  %1468 = vmatprep.subr.bf16.mxu0 0
  %1469 = vmatpush1.bf16.msra.mxu0 0
  %1470 = vmatprep.subr.bf16.mxu0 0
  %1471 = vmatpush1.bf16.msra.mxu0 0
  %1472 = vmatprep.subr.bf16.mxu0 0
  %1473 = vmatpush1.bf16.msra.mxu0 0
  %1474 = vmatprep.subr.bf16.mxu0 0
  %1475 = vmatpush1.bf16.msra.mxu0 0
  %1476 = vmatprep.subr.bf16.mxu0 0
  %1477 = vmatpush1.bf16.msra.mxu0 0
  %1478 = vmatprep.subr.bf16.mxu0 0
  %1479 = vmatpush1.bf16.msra.mxu0 0
  %1480 = vmatprep.subr.bf16.mxu0 0
  %1481 = vmatpush1.bf16.msra.mxu0 0
  %1482 = vmatprep.subr.bf16.mxu0 0
  %1483 = vmatpush1.bf16.msra.mxu0 0
  %1484 = vmatprep.subr.bf16.mxu0 0
  %1485 = vmatpush1.bf16.msra.mxu0 0
  %1486 = vmatprep.subr.bf16.mxu0 0
  %1487 = vmatpush1.bf16.msra.mxu0 0
  %1488 = vmatprep.subr.bf16.mxu0 0
  %1489 = vmatpush1.bf16.msra.mxu0 0
  %1490 = vmatprep.subr.bf16.mxu0 0
  %1491 = vmatpush1.bf16.msra.mxu0 0
  %1492 = vmatprep.subr.bf16.mxu0 0
  %1493 = vmatpush1.bf16.msra.mxu0 0
  %1494 = vmatprep.subr.bf16.mxu0 0
  %1495 = vmatpush1.bf16.msra.mxu0 0
  %1496 = vmatprep.subr.bf16.mxu0 0
  %1497 = vmatpush1.bf16.msra.mxu0 0
  %1498 = vmatprep.mubr.bf16.mxu0 0
  %1499 = vmatmul.mubr.bf16.gmra.mrb[0].mxu0 %v1446
  %v1500 = vpop.f32.mrb[0].mxu0
  %v1501 = vadd.f32 0.0, %v1500
  %v1502 = vpop.f32.mrb[0].mxu0
  %v1503 = vadd.f32 0.0, %v1502
  %v1504 = vpop.f32.mrb[0].mxu0
  %v1505 = vpop.f32.mrb[0].mxu0
  %1506 = vdwg.mxu0
  %1507 = vmatprep.subr.bf16.mxu0 %v1458
  %1508 = vmatpush1.bf16.msra.mxu0 %v1455
  %1509 = vmatprep.subr.bf16.mxu0 0
  %1510 = vmatpush1.bf16.msra.mxu0 0
  %1511 = vmatprep.subr.bf16.mxu0 0
  %1512 = vmatpush1.bf16.msra.mxu0 0
  %1513 = vmatprep.subr.bf16.mxu0 0
  %1514 = vmatpush1.bf16.msra.mxu0 0
  %1515 = vmatprep.subr.bf16.mxu0 0
  %1516 = vmatpush1.bf16.msra.mxu0 0
  %1517 = vmatprep.subr.bf16.mxu0 0
  %1518 = vmatpush1.bf16.msra.mxu0 0
  %1519 = vmatprep.subr.bf16.mxu0 0
  %1520 = vmatpush1.bf16.msra.mxu0 0
  %1521 = vmatprep.subr.bf16.mxu0 0
  %1522 = vmatpush1.bf16.msra.mxu0 0
  %1523 = vmatprep.subr.bf16.mxu0 0
  %1524 = vmatpush1.bf16.msra.mxu0 0
  %1525 = vmatprep.subr.bf16.mxu0 0
  %1526 = vmatpush1.bf16.msra.mxu0 0
  %1527 = vmatprep.subr.bf16.mxu0 0
  %1528 = vmatpush1.bf16.msra.mxu0 0
  %1529 = vmatprep.subr.bf16.mxu0 0
  %1530 = vmatpush1.bf16.msra.mxu0 0
  %1531 = vmatprep.subr.bf16.mxu0 0
  %1532 = vmatpush1.bf16.msra.mxu0 0
  %1533 = vmatprep.subr.bf16.mxu0 0
  %1534 = vmatpush1.bf16.msra.mxu0 0
  %1535 = vmatprep.subr.bf16.mxu0 0
  %1536 = vmatpush1.bf16.msra.mxu0 0
  %1537 = vmatprep.subr.bf16.mxu0 0
  %1538 = vmatpush1.bf16.msra.mxu0 0
  %1539 = vmatprep.mubr.bf16.mxu0 0
  %1540 = vmatmul.mubr.bf16.gmra.mrb[0].mxu0 %v1446
  %v1541 = vpop.f32.mrb[0].mxu0
  %v1542 = vadd.f32 0.0, %v1541
  %v1543 = vpop.f32.mrb[0].mxu0
  %v1544 = vadd.f32 0.0, %v1543
  %v1545 = vpop.f32.mrb[0].mxu0
  %v1546 = vpop.f32.mrb[0].mxu0
  %1547 = vdwg.mxu0
  %1548 = vmatprep.subr.bf16.mxu0 %v1464
  %1549 = vmatpush1.bf16.msra.mxu0 %v1461
  %1550 = vmatprep.subr.bf16.mxu0 0
  %1551 = vmatpush1.bf16.msra.mxu0 0
  %1552 = vmatprep.subr.bf16.mxu0 0
  %1553 = vmatpush1.bf16.msra.mxu0 0
  %1554 = vmatprep.subr.bf16.mxu0 0
  %1555 = vmatpush1.bf16.msra.mxu0 0
  %1556 = vmatprep.subr.bf16.mxu0 0
  %1557 = vmatpush1.bf16.msra.mxu0 0
  %1558 = vmatprep.subr.bf16.mxu0 0
  %1559 = vmatpush1.bf16.msra.mxu0 0
  %1560 = vmatprep.subr.bf16.mxu0 0
  %1561 = vmatpush1.bf16.msra.mxu0 0
  %1562 = vmatprep.subr.bf16.mxu0 0
  %1563 = vmatpush1.bf16.msra.mxu0 0
  %1564 = vmatprep.subr.bf16.mxu0 0
  %1565 = vmatpush1.bf16.msra.mxu0 0
  %1566 = vmatprep.subr.bf16.mxu0 0
  %1567 = vmatpush1.bf16.msra.mxu0 0
  %1568 = vmatprep.subr.bf16.mxu0 0
  %1569 = vmatpush1.bf16.msra.mxu0 0
  %1570 = vmatprep.subr.bf16.mxu0 0
  %1571 = vmatpush1.bf16.msra.mxu0 0
  %1572 = vmatprep.subr.bf16.mxu0 0
  %1573 = vmatpush1.bf16.msra.mxu0 0
  %1574 = vmatprep.subr.bf16.mxu0 0
  %1575 = vmatpush1.bf16.msra.mxu0 0
  %1576 = vmatprep.subr.bf16.mxu0 0
  %1577 = vmatpush1.bf16.msra.mxu0 0
  %1578 = vmatprep.subr.bf16.mxu0 0
  %1579 = vmatpush1.bf16.msra.mxu0 0
  %1580 = vmatprep.mubr.bf16.mxu0 0
  %1581 = vmatmul.mubr.bf16.gmra.mrb[0].mxu0 %v1446
  %v1582 = vpop.f32.mrb[0].mxu0
  %v1583 = vadd.f32 0.0, %v1582
  %v1584 = vpop.f32.mrb[0].mxu0
  %v1585 = vadd.f32 0.0, %v1584
  %v1586 = vpop.f32.mrb[0].mxu0
  %v1587 = vpop.f32.mrb[0].mxu0
  %1588 = vdwg.mxu0
  %v1589 = vadd.f32 %v1416, %v1501
  %v1590 = vadd.f32 %v1417, %v1503
  %v1591 = vadd.f32 %v1418, %v1542
  %v1592 = vadd.f32 %v1419, %v1544
  %v1593 = vadd.f32 %v1420, %v1583
  %v1594 = vadd.f32 %v1421, %v1585
  %1595 = vst [vmem:[%s3] sm:$0xff] %v1589
  %1596 = vst [vmem:[%s3 + $0x8] sm:$0xff] %v1590
  %1597 = vst [vmem:[%s3 + $0x10] sm:$0xff] %v1591
  %1598 = vst [vmem:[%s3 + $0x18] sm:$0xff] %v1592
  %1599 = vst [vmem:[%s3 + $0x20] sm:$0xff] %v1593
  %1600 = vst [vmem:[%s3 + $0x28] sm:$0xff] %v1594
  // Predicated region
  $region14: #{conv_block_forward.1} parent=0 // pred_check
    _
  $region15: #{conv_block_forward.1} parent=0 // pred_check_branch
    %1602 = sbr.rel (0) target = $region17
  $region16: #{conv_block_forward.1} parent=0 // pred_region
    _
  $region17: #{conv_block_forward.1} parent=0 // pred_fallthru
    _
  // Predicated region
  $region18: #{conv_block_forward.1} parent=0 // pred_check
    _
  $region19: #{conv_block_forward.1} parent=0 // pred_check_branch
    %1604 = sbr.rel (0) target = $region21
  $region20: #{conv_block_forward.1} parent=0 // pred_region
    _
  $region21: #{conv_block_forward.1} parent=0 // pred_fallthru
    _

</llo_original>
